<compile_context>
chip_gen: v7x
topology: tpu7x:2x2x1
jax: 0.10.0
libtpu: 0.0.40
codegen_flags: <defaults>
</compile_context>

<pallas_src>
import jax
import jax.numpy as jnp
from jax.experimental import pallas as pl
from jax.experimental.pallas import tpu as pltpu

# --- synthetic module hyperparameters (src.models.z_size / x_size) ---
Z_SIZE = 64
X_SIZE = 16
H1, H2, H3 = 512, 128, 32
OUT_PAD = 128          # lane-dense padded output width (>= X_SIZE)
LN_EPS = 1e-5
LEAK = 0.2


def _layernorm_lrelu(h, gamma, beta):
    """LayerNorm over last dim (biased variance, eps=1e-5) + LeakyReLU(0.2)."""
    mean = jnp.mean(h, axis=-1, keepdims=True)
    centered = h - mean
    var = jnp.mean(centered * centered, axis=-1, keepdims=True)
    inv = jax.lax.rsqrt(var + LN_EPS)          # EUP slot, off the VALU path
    y = centered * inv * gamma + beta
    return jnp.where(y > 0, y, LEAK * y)


def gan_g_kernel(x_ref,
                 w1_ref, g1_ref, b1_ref,
                 w2_ref, g2_ref, b2_ref,
                 w3_ref, g3_ref, b3_ref,
                 w4_ref, b4_ref,
                 o_ref):
    # bf16 operands, f32 accumulation on the MXU.
    x = x_ref[...]                                                  # bf16

    # Block 1: Linear(z,512,no bias) -> LN(512) -> LeakyReLU
    h = jnp.dot(x, w1_ref[...], preferred_element_type=jnp.float32)
    h = _layernorm_lrelu(h, g1_ref[...], b1_ref[...])

    # Block 2: Linear(512,128,no bias) -> LN(128) -> LeakyReLU
    h = jnp.dot(h.astype(jnp.bfloat16), w2_ref[...],
                preferred_element_type=jnp.float32)
    h = _layernorm_lrelu(h, g2_ref[...], b2_ref[...])

    # Block 3: Linear(128,32,no bias) -> LN(32) -> LeakyReLU
    h = jnp.dot(h.astype(jnp.bfloat16), w3_ref[...],
                preferred_element_type=jnp.float32)
    h = _layernorm_lrelu(h, g3_ref[...], b3_ref[...])

    # Output: Linear(32, OUT_PAD) with bias (zero-padded beyond X_SIZE).
    out = jnp.dot(h.astype(jnp.bfloat16), w4_ref[...],
                  preferred_element_type=jnp.float32) + b4_ref[...]
    o_ref[...] = out.astype(o_ref.dtype)        # lane-dense (block_b, 128) store


def _round_up(n, m):
    return ((n + m - 1) // m) * m


def _choose_block_b(B, target=512):
    """Large batch tile for MXU occupancy; >= 2 grid steps when the batch
    allows it (v7x megacore). Returns (block_b, padded_batch)."""
    Bp = _round_up(B, 8)
    bb = min(target, Bp)
    if Bp // bb < 2 and Bp >= 16:
        bb = max(8, _round_up(Bp // 2, 8))
    Bp = _round_up(Bp, bb)
    return bb, Bp


def gan_g_forward(x, params, *, block_b=None):
    B = x.shape[0]
    if block_b is None:
        block_b, Bp = _choose_block_b(B)
    else:
        assert block_b % 8 == 0
        Bp = _round_up(B, block_b)

    (w1, g1, b1, w2, g2, b2, w3, g3, b3, w4, b4) = params

    # Pad batch to a multiple of block_b (rows are independent -> safe).
    if Bp != B:
        x = jnp.pad(x, ((0, Bp - B), (0, 0)))
    x = x.astype(jnp.bfloat16)

    # bf16 weights (halves DMA bytes); LN affine + bias stay f32.
    w1b = w1.astype(jnp.bfloat16)
    w2b = w2.astype(jnp.bfloat16)
    w3b = w3.astype(jnp.bfloat16)
    # Pad last layer to a lane-dense 128-wide output slab.
    w4b = jnp.pad(w4, ((0, 0), (0, OUT_PAD - X_SIZE))).astype(jnp.bfloat16)
    b4p = jnp.pad(b4, ((0, 0), (0, OUT_PAD - X_SIZE))).astype(jnp.float32)

    def full_spec(shape):
        # Parameter resident in VMEM; constant index_map -> DMA'd once,
        # revisits are skipped.  (Single-buffering them via pl.Buffered(1)
        # would be a further minor VMEM saving.)
        nd = len(shape)
        return pl.BlockSpec(shape, lambda i: (0,) * nd)

    grid = (Bp // block_b,)

    flops = 2 * Bp * (Z_SIZE * H1 + H1 * H2 + H2 * H3 + H3 * OUT_PAD)
    bytes_accessed = (
        Bp * Z_SIZE * 2                                   # x (bf16)
        + (Z_SIZE * H1 + H1 * H2 + H2 * H3 + H3 * OUT_PAD) * 2   # weights (bf16)
        + (2 * H1 + 2 * H2 + 2 * H3 + OUT_PAD) * 4        # LN affine + bias (f32)
        + Bp * OUT_PAD * 4                                # output (f32)
    )

    out_padded = pl.pallas_call(
        gan_g_kernel,
        out_shape=jax.ShapeDtypeStruct((Bp, OUT_PAD), jnp.float32),
        grid_spec=pltpu.PrefetchScalarGridSpec(
            num_scalar_prefetch=0,
            grid=grid,
            in_specs=[
                pl.BlockSpec((block_b, Z_SIZE), lambda i: (i, 0)),   # x tile
                full_spec(w1b.shape), full_spec(g1.shape), full_spec(b1.shape),
                full_spec(w2b.shape), full_spec(g2.shape), full_spec(b2.shape),
                full_spec(w3b.shape), full_spec(g3.shape), full_spec(b3.shape),
                full_spec(w4b.shape), full_spec(b4p.shape),
            ],
            out_specs=pl.BlockSpec((block_b, OUT_PAD), lambda i: (i, 0)),
        ),
        compiler_params=pltpu.CompilerParams(
            dimension_semantics=("parallel",),
            vmem_limit_bytes=32 * 1024 * 1024,   # v5e default is 16 MiB
        ),
        cost_estimate=pl.CostEstimate(
            flops=flops,
            transcendentals=3 * Bp,              # one rsqrt per row per LN
            bytes_accessed=bytes_accessed,
        ),
    )(x, w1b, g1, b1, w2b, g2, b2, w3b, g3, b3, w4b, b4p)

    # Strip batch padding and the lane padding of the output.
    return out_padded[:B, :X_SIZE]


def init_params(key):
    """Deterministic synthetic init (stand-in for src.utils.init_weights)."""
    ks = jax.random.split(key, 5)

    def lin(k, fan_in, fan_out):
        # normal(0, 0.02) as a typical GAN init
        return (0.02 * jax.random.normal(k, (fan_in, fan_out))).astype(jnp.float32)

    w1 = lin(ks[0], Z_SIZE, H1)
    w2 = lin(ks[1], H1, H2)
    w3 = lin(ks[2], H2, H3)
    w4 = lin(ks[3], H3, X_SIZE)
    b4 = jnp.zeros((1, X_SIZE), jnp.float32)

    # LayerNorm affine params (gamma=1, beta=0), kept 2D (1, F) for lane layout.
    g1, b1 = jnp.ones((1, H1), jnp.float32), jnp.zeros((1, H1), jnp.float32)
    g2, b2 = jnp.ones((1, H2), jnp.float32), jnp.zeros((1, H2), jnp.float32)
    g3, b3 = jnp.ones((1, H3), jnp.float32), jnp.zeros((1, H3), jnp.float32)

    return (w1, g1, b1, w2, g2, b2, w3, g3, b3, w4, b4)


def reference_forward(x, params, *, bf16_matmul=False):
    """Pure-JAX reference mirroring the PyTorch forward.
    bf16_matmul=True mirrors the kernel's bf16-operand / f32-accumulate dots."""
    (w1, g1, b1, w2, g2, b2, w3, g3, b3, w4, b4) = params
    cast = (lambda a: a.astype(jnp.bfloat16)) if bf16_matmul else (lambda a: a)

    def ln_lrelu(h, g, b):
        mean = jnp.mean(h, axis=-1, keepdims=True)
        var = jnp.mean((h - mean) ** 2, axis=-1, keepdims=True)
        y = (h - mean) / jnp.sqrt(var + LN_EPS) * g + b
        return jnp.where(y > 0, y, LEAK * y)

    def mm(a, w):
        return jnp.dot(cast(a), cast(w), preferred_element_type=jnp.float32)

    h = ln_lrelu(mm(x, w1), g1, b1)
    h = ln_lrelu(mm(h, w2), g2, b2)
    h = ln_lrelu(mm(h, w3), g3, b3)
    return mm(h, w4) + b4


if __name__ == "__main__":
    key = jax.random.PRNGKey(0)
    k_p, k_x = jax.random.split(key)

    params = init_params(k_p)
    batch = 16  # small test batch -> adaptive tiling gives block_b=8, grid=(2,)
    x = jax.random.normal(k_x, (batch, Z_SIZE), dtype=jnp.float32)

    out = gan_g_forward(x, params)
    out = jax.block_until_ready(out)
    assert out.shape == (batch, X_SIZE)

    # Tight check vs. a reference that mirrors the kernel's bf16/f32 dots.
    ref_bf16 = reference_forward(x, params, bf16_matmul=True)
    assert jnp.allclose(out, ref_bf16, atol=1e-4, rtol=1e-4), \
        "mismatch vs bf16-mirrored JAX reference"

    # Sanity check vs. the full-precision PyTorch-equivalent reference.
    ref_f32 = reference_forward(x, params, bf16_matmul=False)
    assert jnp.allclose(out, ref_f32, atol=5e-2, rtol=5e-2), \
        "mismatch vs f32 JAX reference"

    print("KERNEL_OK")
</pallas_src>

<mosaic_0001>
module attributes {stable_mosaic.version = 11 : i64} {
  func.func @gan_g_kernel(%arg0: i32, %arg1: memref<8x64xbf16, #tpu.memory_space<vmem>>, %arg2: memref<64x512xbf16, #tpu.memory_space<vmem>>, %arg3: memref<1x512xf32, #tpu.memory_space<vmem>>, %arg4: memref<1x512xf32, #tpu.memory_space<vmem>>, %arg5: memref<512x128xbf16, #tpu.memory_space<vmem>>, %arg6: memref<1x128xf32, #tpu.memory_space<vmem>>, %arg7: memref<1x128xf32, #tpu.memory_space<vmem>>, %arg8: memref<128x32xbf16, #tpu.memory_space<vmem>>, %arg9: memref<1x32xf32, #tpu.memory_space<vmem>>, %arg10: memref<1x32xf32, #tpu.memory_space<vmem>>, %arg11: memref<32x128xbf16, #tpu.memory_space<vmem>>, %arg12: memref<1x128xf32, #tpu.memory_space<vmem>>, %arg13: memref<8x128xf32, #tpu.memory_space<vmem>>) attributes {dimension_semantics = [#tpu.dimension_semantics<parallel>], iteration_bounds = array<i64: 2>, scalar_prefetch = 0 : i64, scratch_operands = 0 : i64, tpu.core_type = #tpu.core_type<tc>, window_params = [{transform_indices = @transform_0, window_bounds = array<i64: 8, 64>}, {pipeline_mode = #tpu.pipeline_mode<synchronous>, transform_indices = @transform_1, window_bounds = array<i64: 64, 512>}, {pipeline_mode = #tpu.pipeline_mode<synchronous>, transform_indices = @transform_2, window_bounds = array<i64: 1, 512>}, {pipeline_mode = #tpu.pipeline_mode<synchronous>, transform_indices = @transform_3, window_bounds = array<i64: 1, 512>}, {pipeline_mode = #tpu.pipeline_mode<synchronous>, transform_indices = @transform_4, window_bounds = array<i64: 512, 128>}, {pipeline_mode = #tpu.pipeline_mode<synchronous>, transform_indices = @transform_5, window_bounds = array<i64: 1, 128>}, {pipeline_mode = #tpu.pipeline_mode<synchronous>, transform_indices = @transform_6, window_bounds = array<i64: 1, 128>}, {pipeline_mode = #tpu.pipeline_mode<synchronous>, transform_indices = @transform_7, window_bounds = array<i64: 128, 32>}, {pipeline_mode = #tpu.pipeline_mode<synchronous>, transform_indices = @transform_8, window_bounds = array<i64: 1, 32>}, {pipeline_mode = #tpu.pipeline_mode<synchronous>, transform_indices = @transform_9, window_bounds = array<i64: 1, 32>}, {pipeline_mode = #tpu.pipeline_mode<synchronous>, transform_indices = @transform_10, window_bounds = array<i64: 32, 128>}, {pipeline_mode = #tpu.pipeline_mode<synchronous>, transform_indices = @transform_11, window_bounds = array<i64: 1, 128>}, {transform_indices = @transform_12, window_bounds = array<i64: 8, 128>}]} {
    %c0 = arith.constant 0 : index
    %c0_0 = arith.constant 0 : index
    %0 = vector.load %arg1[%c0, %c0_0] : memref<8x64xbf16, #tpu.memory_space<vmem>>, vector<8x64xbf16>
    %c0_1 = arith.constant 0 : index
    %c0_2 = arith.constant 0 : index
    %1 = vector.load %arg2[%c0_1, %c0_2] : memref<64x512xbf16, #tpu.memory_space<vmem>>, vector<64x512xbf16>
    %cst = arith.constant dense<0.000000e+00> : vector<8x512xf32>
    %2 = tpu.matmul %0, %1, %cst {dimension_numbers = #tpu.dot_dimension_numbers<[1], [0], [0], [1], [0, 0, 1, 1], [], []>} : vector<8x64xbf16>, vector<64x512xbf16>, vector<8x512xf32> -> vector<8x512xf32>
    %c0_3 = arith.constant 0 : index
    %c0_4 = arith.constant 0 : index
    %3 = vector.load %arg3[%c0_3, %c0_4] : memref<1x512xf32, #tpu.memory_space<vmem>>, vector<1x512xf32>
    %c0_5 = arith.constant 0 : index
    %c0_6 = arith.constant 0 : index
    %4 = vector.load %arg4[%c0_5, %c0_6] : memref<1x512xf32, #tpu.memory_space<vmem>>, vector<1x512xf32>
    %cst_7 = arith.constant dense<0.000000e+00> : vector<8xf32>
    %5 = vector.multi_reduction <add>, %2, %cst_7 [1] : vector<8x512xf32> to vector<8xf32>
    %6 = vector.shape_cast %5 : vector<8xf32> to vector<8x1xf32>
    %cst_8 = arith.constant 5.120000e+02 : f32
    %7 = vector.broadcast %cst_8 : f32 to vector<8x1xf32>
    %8 = arith.divf %6, %7 : vector<8x1xf32>
    %9 = vector.broadcast %8 : vector<8x1xf32> to vector<8x512xf32>
    %10 = arith.subf %2, %9 : vector<8x512xf32>
    %11 = arith.mulf %10, %10 : vector<8x512xf32>
    %cst_9 = arith.constant dense<0.000000e+00> : vector<8xf32>
    %12 = vector.multi_reduction <add>, %11, %cst_9 [1] : vector<8x512xf32> to vector<8xf32>
    %13 = vector.shape_cast %12 : vector<8xf32> to vector<8x1xf32>
    %cst_10 = arith.constant 5.120000e+02 : f32
    %14 = vector.broadcast %cst_10 : f32 to vector<8x1xf32>
    %15 = arith.divf %13, %14 : vector<8x1xf32>
    %cst_11 = arith.constant 9.99999974E-6 : f32
    %16 = vector.broadcast %cst_11 : f32 to vector<8x1xf32>
    %17 = arith.addf %15, %16 : vector<8x1xf32>
    %18 = math.rsqrt %17 : vector<8x1xf32>
    %19 = vector.broadcast %18 : vector<8x1xf32> to vector<8x512xf32>
    %20 = arith.mulf %10, %19 : vector<8x512xf32>
    %21 = vector.broadcast %3 : vector<1x512xf32> to vector<8x512xf32>
    %22 = arith.mulf %20, %21 : vector<8x512xf32>
    %23 = vector.broadcast %4 : vector<1x512xf32> to vector<8x512xf32>
    %24 = arith.addf %22, %23 : vector<8x512xf32>
    %cst_12 = arith.constant 0.000000e+00 : f32
    %25 = vector.broadcast %cst_12 : f32 to vector<8x512xf32>
    %26 = arith.cmpf ogt, %24, %25 : vector<8x512xf32>
    %cst_13 = arith.constant 2.000000e-01 : f32
    %27 = vector.broadcast %cst_13 : f32 to vector<8x512xf32>
    %28 = arith.mulf %27, %24 : vector<8x512xf32>
    %29 = arith.select %26, %24, %28 : vector<8x512xi1>, vector<8x512xf32>
    %30 = arith.truncf %29 : vector<8x512xf32> to vector<8x512xbf16>
    %c0_14 = arith.constant 0 : index
    %c0_15 = arith.constant 0 : index
    %31 = vector.load %arg5[%c0_14, %c0_15] : memref<512x128xbf16, #tpu.memory_space<vmem>>, vector<512x128xbf16>
    %cst_16 = arith.constant dense<0.000000e+00> : vector<8x128xf32>
    %32 = tpu.matmul %30, %31, %cst_16 {dimension_numbers = #tpu.dot_dimension_numbers<[1], [0], [0], [1], [0, 0, 1, 1], [], []>} : vector<8x512xbf16>, vector<512x128xbf16>, vector<8x128xf32> -> vector<8x128xf32>
    %c0_17 = arith.constant 0 : index
    %c0_18 = arith.constant 0 : index
    %33 = vector.load %arg6[%c0_17, %c0_18] : memref<1x128xf32, #tpu.memory_space<vmem>>, vector<1x128xf32>
    %c0_19 = arith.constant 0 : index
    %c0_20 = arith.constant 0 : index
    %34 = vector.load %arg7[%c0_19, %c0_20] : memref<1x128xf32, #tpu.memory_space<vmem>>, vector<1x128xf32>
    %cst_21 = arith.constant dense<0.000000e+00> : vector<8xf32>
    %35 = vector.multi_reduction <add>, %32, %cst_21 [1] : vector<8x128xf32> to vector<8xf32>
    %36 = vector.shape_cast %35 : vector<8xf32> to vector<8x1xf32>
    %cst_22 = arith.constant 1.280000e+02 : f32
    %37 = vector.broadcast %cst_22 : f32 to vector<8x1xf32>
    %38 = arith.divf %36, %37 : vector<8x1xf32>
    %39 = vector.broadcast %38 : vector<8x1xf32> to vector<8x128xf32>
    %40 = arith.subf %32, %39 : vector<8x128xf32>
    %41 = arith.mulf %40, %40 : vector<8x128xf32>
    %cst_23 = arith.constant dense<0.000000e+00> : vector<8xf32>
    %42 = vector.multi_reduction <add>, %41, %cst_23 [1] : vector<8x128xf32> to vector<8xf32>
    %43 = vector.shape_cast %42 : vector<8xf32> to vector<8x1xf32>
    %cst_24 = arith.constant 1.280000e+02 : f32
    %44 = vector.broadcast %cst_24 : f32 to vector<8x1xf32>
    %45 = arith.divf %43, %44 : vector<8x1xf32>
    %cst_25 = arith.constant 9.99999974E-6 : f32
    %46 = vector.broadcast %cst_25 : f32 to vector<8x1xf32>
    %47 = arith.addf %45, %46 : vector<8x1xf32>
    %48 = math.rsqrt %47 : vector<8x1xf32>
    %49 = vector.broadcast %48 : vector<8x1xf32> to vector<8x128xf32>
    %50 = arith.mulf %40, %49 : vector<8x128xf32>
    %51 = vector.broadcast %33 : vector<1x128xf32> to vector<8x128xf32>
    %52 = arith.mulf %50, %51 : vector<8x128xf32>
    %53 = vector.broadcast %34 : vector<1x128xf32> to vector<8x128xf32>
    %54 = arith.addf %52, %53 : vector<8x128xf32>
    %cst_26 = arith.constant 0.000000e+00 : f32
    %55 = vector.broadcast %cst_26 : f32 to vector<8x128xf32>
    %56 = arith.cmpf ogt, %54, %55 : vector<8x128xf32>
    %cst_27 = arith.constant 2.000000e-01 : f32
    %57 = vector.broadcast %cst_27 : f32 to vector<8x128xf32>
    %58 = arith.mulf %57, %54 : vector<8x128xf32>
    %59 = arith.select %56, %54, %58 : vector<8x128xi1>, vector<8x128xf32>
    %60 = arith.truncf %59 : vector<8x128xf32> to vector<8x128xbf16>
    %c0_28 = arith.constant 0 : index
    %c0_29 = arith.constant 0 : index
    %61 = vector.load %arg8[%c0_28, %c0_29] : memref<128x32xbf16, #tpu.memory_space<vmem>>, vector<128x32xbf16>
    %cst_30 = arith.constant dense<0.000000e+00> : vector<8x32xf32>
    %62 = tpu.matmul %60, %61, %cst_30 {dimension_numbers = #tpu.dot_dimension_numbers<[1], [0], [0], [1], [0, 0, 1, 1], [], []>} : vector<8x128xbf16>, vector<128x32xbf16>, vector<8x32xf32> -> vector<8x32xf32>
    %c0_31 = arith.constant 0 : index
    %c0_32 = arith.constant 0 : index
    %63 = vector.load %arg9[%c0_31, %c0_32] : memref<1x32xf32, #tpu.memory_space<vmem>>, vector<1x32xf32>
    %c0_33 = arith.constant 0 : index
    %c0_34 = arith.constant 0 : index
    %64 = vector.load %arg10[%c0_33, %c0_34] : memref<1x32xf32, #tpu.memory_space<vmem>>, vector<1x32xf32>
    %cst_35 = arith.constant dense<0.000000e+00> : vector<8xf32>
    %65 = vector.multi_reduction <add>, %62, %cst_35 [1] : vector<8x32xf32> to vector<8xf32>
    %66 = vector.shape_cast %65 : vector<8xf32> to vector<8x1xf32>
    %cst_36 = arith.constant 3.200000e+01 : f32
    %67 = vector.broadcast %cst_36 : f32 to vector<8x1xf32>
    %68 = arith.divf %66, %67 : vector<8x1xf32>
    %69 = vector.broadcast %68 : vector<8x1xf32> to vector<8x32xf32>
    %70 = arith.subf %62, %69 : vector<8x32xf32>
    %71 = arith.mulf %70, %70 : vector<8x32xf32>
    %cst_37 = arith.constant dense<0.000000e+00> : vector<8xf32>
    %72 = vector.multi_reduction <add>, %71, %cst_37 [1] : vector<8x32xf32> to vector<8xf32>
    %73 = vector.shape_cast %72 : vector<8xf32> to vector<8x1xf32>
    %cst_38 = arith.constant 3.200000e+01 : f32
    %74 = vector.broadcast %cst_38 : f32 to vector<8x1xf32>
    %75 = arith.divf %73, %74 : vector<8x1xf32>
    %cst_39 = arith.constant 9.99999974E-6 : f32
    %76 = vector.broadcast %cst_39 : f32 to vector<8x1xf32>
    %77 = arith.addf %75, %76 : vector<8x1xf32>
    %78 = math.rsqrt %77 : vector<8x1xf32>
    %79 = vector.broadcast %78 : vector<8x1xf32> to vector<8x32xf32>
    %80 = arith.mulf %70, %79 : vector<8x32xf32>
    %81 = vector.broadcast %63 : vector<1x32xf32> to vector<8x32xf32>
    %82 = arith.mulf %80, %81 : vector<8x32xf32>
    %83 = vector.broadcast %64 : vector<1x32xf32> to vector<8x32xf32>
    %84 = arith.addf %82, %83 : vector<8x32xf32>
    %cst_40 = arith.constant 0.000000e+00 : f32
    %85 = vector.broadcast %cst_40 : f32 to vector<8x32xf32>
    %86 = arith.cmpf ogt, %84, %85 : vector<8x32xf32>
    %cst_41 = arith.constant 2.000000e-01 : f32
    %87 = vector.broadcast %cst_41 : f32 to vector<8x32xf32>
    %88 = arith.mulf %87, %84 : vector<8x32xf32>
    %89 = arith.select %86, %84, %88 : vector<8x32xi1>, vector<8x32xf32>
    %90 = arith.truncf %89 : vector<8x32xf32> to vector<8x32xbf16>
    %c0_42 = arith.constant 0 : index
    %c0_43 = arith.constant 0 : index
    %91 = vector.load %arg11[%c0_42, %c0_43] : memref<32x128xbf16, #tpu.memory_space<vmem>>, vector<32x128xbf16>
    %cst_44 = arith.constant dense<0.000000e+00> : vector<8x128xf32>
    %92 = tpu.matmul %90, %91, %cst_44 {dimension_numbers = #tpu.dot_dimension_numbers<[1], [0], [0], [1], [0, 0, 1, 1], [], []>} : vector<8x32xbf16>, vector<32x128xbf16>, vector<8x128xf32> -> vector<8x128xf32>
    %c0_45 = arith.constant 0 : index
    %c0_46 = arith.constant 0 : index
    %93 = vector.load %arg12[%c0_45, %c0_46] : memref<1x128xf32, #tpu.memory_space<vmem>>, vector<1x128xf32>
    %94 = vector.broadcast %93 : vector<1x128xf32> to vector<8x128xf32>
    %95 = arith.addf %92, %94 : vector<8x128xf32>
    %c0_47 = arith.constant 0 : index
    %c0_48 = arith.constant 0 : index
    %96 = vector.load %arg13[%c0_47, %c0_48] : memref<8x128xf32, #tpu.memory_space<vmem>>, vector<8x128xf32>
    tpu.vector_store %arg13[%c0_47, %c0_48], %95 {strides = array<i32>} : memref<8x128xf32, #tpu.memory_space<vmem>>, vector<8x128xf32>,
    return
  }
  func.func @transform_0(%arg0: i32) -> (i32, i32) {
    %c0_i32 = arith.constant 0 : i32
    %c0_i32_0 = arith.constant 0 : i32
    return %arg0, %c0_i32 : i32, i32
  }
  func.func @transform_1(%arg0: i32) -> (i32, i32) {
    %c0_i32 = arith.constant 0 : i32
    %c0_i32_0 = arith.constant 0 : i32
    %c0_i32_1 = arith.constant 0 : i32
    return %c0_i32, %c0_i32_0 : i32, i32
  }
  func.func @transform_2(%arg0: i32) -> (i32, i32) {
    %c0_i32 = arith.constant 0 : i32
    %c0_i32_0 = arith.constant 0 : i32
    %c0_i32_1 = arith.constant 0 : i32
    return %c0_i32, %c0_i32_0 : i32, i32
  }
  func.func @transform_3(%arg0: i32) -> (i32, i32) {
    %c0_i32 = arith.constant 0 : i32
    %c0_i32_0 = arith.constant 0 : i32
    %c0_i32_1 = arith.constant 0 : i32
    return %c0_i32, %c0_i32_0 : i32, i32
  }
  func.func @transform_4(%arg0: i32) -> (i32, i32) {
    %c0_i32 = arith.constant 0 : i32
    %c0_i32_0 = arith.constant 0 : i32
    %c0_i32_1 = arith.constant 0 : i32
    return %c0_i32, %c0_i32_0 : i32, i32
  }
  func.func @transform_5(%arg0: i32) -> (i32, i32) {
    %c0_i32 = arith.constant 0 : i32
    %c0_i32_0 = arith.constant 0 : i32
    %c0_i32_1 = arith.constant 0 : i32
    return %c0_i32, %c0_i32_0 : i32, i32
  }
  func.func @transform_6(%arg0: i32) -> (i32, i32) {
    %c0_i32 = arith.constant 0 : i32
    %c0_i32_0 = arith.constant 0 : i32
    %c0_i32_1 = arith.constant 0 : i32
    return %c0_i32, %c0_i32_0 : i32, i32
  }
  func.func @transform_7(%arg0: i32) -> (i32, i32) {
    %c0_i32 = arith.constant 0 : i32
    %c0_i32_0 = arith.constant 0 : i32
    %c0_i32_1 = arith.constant 0 : i32
    return %c0_i32, %c0_i32_0 : i32, i32
  }
  func.func @transform_8(%arg0: i32) -> (i32, i32) {
    %c0_i32 = arith.constant 0 : i32
    %c0_i32_0 = arith.constant 0 : i32
    %c0_i32_1 = arith.constant 0 : i32
    return %c0_i32, %c0_i32_0 : i32, i32
  }
  func.func @transform_9(%arg0: i32) -> (i32, i32) {
    %c0_i32 = arith.constant 0 : i32
    %c0_i32_0 = arith.constant 0 : i32
    %c0_i32_1 = arith.constant 0 : i32
    return %c0_i32, %c0_i32_0 : i32, i32
  }
  func.func @transform_10(%arg0: i32) -> (i32, i32) {
    %c0_i32 = arith.constant 0 : i32
    %c0_i32_0 = arith.constant 0 : i32
    %c0_i32_1 = arith.constant 0 : i32
    return %c0_i32, %c0_i32_0 : i32, i32
  }
  func.func @transform_11(%arg0: i32) -> (i32, i32) {
    %c0_i32 = arith.constant 0 : i32
    %c0_i32_0 = arith.constant 0 : i32
    %c0_i32_1 = arith.constant 0 : i32
    return %c0_i32, %c0_i32_0 : i32, i32
  }
  func.func @transform_12(%arg0: i32) -> (i32, i32) {
    %c0_i32 = arith.constant 0 : i32
    %c0_i32_0 = arith.constant 0 : i32
    return %arg0, %c0_i32 : i32, i32
  }
}

</mosaic_0001>

<llo_original>
// kernel: tpu_custom_call.1
$region0: #{tpu_custom_call.1}
  #allocation0 [shape = 'u32[]', space=smem, size = 0x4, offset = 0x4, fixed_abs, tag = 'smem constant byte address 0x4 - core index']
  #allocation1 [shape = 'u32[144,128]{1,0:T(1,128)}', space=vmem, size = 0x12000, scoped, tag = 'internal scratch']
  %s0 = inlined_call_operand.vmem [shape: bf16[16,64], index: 0, kind: input, shape index: {}]
  %s1 = inlined_call_operand.hbm [shape: bf16[64,512], index: 1, kind: input, shape index: {}]
  %s2 = inlined_call_operand.vmem [shape: f32[1,512], index: 2, kind: input, shape index: {}]
  %s3 = inlined_call_operand.vmem [shape: f32[1,512], index: 3, kind: input, shape index: {}]
  %s4 = inlined_call_operand.hbm [shape: bf16[512,128], index: 4, kind: input, shape index: {}]
  %s5 = inlined_call_operand.vmem [shape: f32[1,128], index: 5, kind: input, shape index: {}]
  %s6 = inlined_call_operand.vmem [shape: f32[1,128], index: 6, kind: input, shape index: {}]
  %s7 = inlined_call_operand.vmem [shape: bf16[128,32], index: 7, kind: input, shape index: {}]
  %s8 = inlined_call_operand.vmem [shape: f32[1,32], index: 8, kind: input, shape index: {}]
  %s9 = inlined_call_operand.vmem [shape: f32[1,32], index: 9, kind: input, shape index: {}]
  %s10 = inlined_call_operand.vmem [shape: bf16[32,128], index: 10, kind: input, shape index: {}]
  %s11 = inlined_call_operand.vmem [shape: f32[1,128], index: 11, kind: input, shape index: {}]
  %s12 = inlined_call_operand.hbm [shape: f32[16,128], index: 12, kind: output, shape index: {}]
  %s13 = sld [smem:[#allocation0]]
  $region89: #{tpu_custom_call.1} parent=0
    _
  %s15 = ssub.s32 1, %s13
  %s16 = scalar_select 0, %s15, %s13
  $region1: #{tpu_custom_call.1} parent=0
    #allocation2 [shape = 'u8[65536]{0}', space=vmem, size = 0x10000, scoped, tag = 'input window, operand 1, single buffered']
    #allocation3 [shape = 's32[2]{0}', space=sflag, size = 0x8, scoped, tag = 'scoped memory for tpu_custom_call.1']
    #allocation4 [shape = 's32[2]{0}', space=sflag, size = 0x8, scoped, tag = 'scoped memory for tpu_custom_call.1']
    #allocation5 [shape = 'u8[131072]{0}', space=vmem, size = 0x20000, scoped, tag = 'input window, operand 4, single buffered']
    #allocation6 [shape = 's32[1]{0}', space=sflag, size = 0x4, scoped, tag = 'scoped memory for tpu_custom_call.1']
    #allocation7 [shape = 'u8[8192]{0}', space=vmem, size = 0x2000, scoped, tag = 'output window, operand 0']
    %17 = vsyncpa [#allocation3], 0
    %18 = vsyncpa [#allocation6], 0
    %19 = vsyncpa [#allocation4], 0
    %s20 = scalar_lea.sflag [#allocation4], 1
    %21 = vsyncpa %s20, 0
    loop: start=0, step=1, limit=4
    $region2: #{tpu_custom_call.1} parent=1 // loop_pre_header
      _
    $region3: #{tpu_custom_call.1} parent=1 // loop_header
      %s23 = sphi 0, %s27
      %p24 = scmp.ge.s32.totalorder %s23, 4
      %s33 = sphi 0, %s35
      %s36 = sphi 0, %s33
      %s37 = sphi 0, %s36
      %s53 = sphi 0, %s37
      %s57 = sphi 0, %s57
      %s59 = sphi 0, %s57
      %s60 = sphi 0, %s59
      %s74 = sphi 0, %s60
      %s78 = sphi 0, %s78
      %s80 = sphi 0, %s78
      %s81 = sphi 0, %s80
      %s95 = sphi 0, %s81
      %s99 = sphi 0, %s99
      %s101 = sphi 0, %s99
      %s102 = sphi 0, %s101
      %s116 = sphi 0, %s102
      %s120 = sphi 0, %s120
      %s122 = sphi 0, %s120
      %s123 = sphi 0, %s122
      %s137 = sphi 0, %s123
      %s141 = sphi 0, %s141
      %s143 = sphi 0, %s141
      %s144 = sphi 0, %s143
      %s158 = sphi 0, %s144
      %s162 = sphi 0, %s162
      %s164 = sphi 0, %s162
      %s165 = sphi 0, %s164
      %s179 = sphi 0, %s165
      %s183 = sphi 0, %s183
      %s185 = sphi 0, %s183
      %s186 = sphi 0, %s185
      %s200 = sphi 0, %s186
      %s204 = sphi 0, %s204
      %s206 = sphi 0, %s204
      %s207 = sphi 0, %s206
      %s221 = sphi 0, %s207
      %s225 = sphi 0, %s225
      %s227 = sphi 0, %s225
      %s228 = sphi 0, %s227
      %s242 = sphi 0, %s228
      %s246 = sphi 0, %s246
      %s248 = sphi 0, %s246
      %s249 = sphi 0, %s248
      %s263 = sphi 0, %s249
      %s267 = sphi 0, %s267
      %s269 = sphi 0, %s267
      %s270 = sphi 0, %s269
      %s284 = sphi 0, %s270
      %s290 = sphi 0, %s292
      %s293 = sphi 0, %s290
      %s294 = sphi 0, %s293
      %s310 = sphi 0, %s294
    $region4: #{tpu_custom_call.1} parent=1 // loop_header_branch
      %26 = sbr.rel (%p24) target = $region8
    $region5: #{tpu_custom_call.1} parent=1 // loop_body
      %s28 = ssub.s32 %s23, 1
      %s29 = ssub.s32 %s23, 2
      %s30 = sadd.s32 %s23, 1
      %s31 = ssub.s32 %s23, %s30
      %p32 = scmp.eq.s32.totalorder %s31, 0
      %s34 = sadd.s32 %s33, 1
      %s35 = scalar_select %p32, %s33, %s34
      %p38 = pneg %p32
      %p39 = scmp.eq.s32.totalorder %s23, 1
      %p40 = por %p38, %p39
      %p41 = scmp.ne.s32.totalorder %s33, %s36
      %p42 = scmp.eq.s32.totalorder %s23, 0
      %p43 = por %p41, %p42
      %p44 = scmp.ne.s32.totalorder %s33, %s36
      %p45 = scmp.eq.s32.totalorder %s28, 1
      %p46 = por %p44, %p45
      %p47 = scmp.ne.s32.totalorder %s36, %s37
      %p48 = scmp.eq.s32.totalorder %s28, 0
      %p49 = por %p47, %p48
      %p50 = scmp.ne.s32.totalorder %s36, %s37
      %p51 = scmp.eq.s32.totalorder %s29, 1
      %p52 = por %p50, %p51
      %p54 = scmp.ne.s32.totalorder %s37, %s53
      %p55 = scmp.eq.s32.totalorder %s29, 0
      %p56 = por %p54, %p55
      %s58 = sadd.s32 %s57, 1
      %p61 = scmp.eq.s32.totalorder %s23, 1
      %p62 = scmp.ne.s32.totalorder %s57, %s59
      %p63 = scmp.eq.s32.totalorder %s23, 0
      %p64 = por %p62, %p63
      %p65 = scmp.ne.s32.totalorder %s57, %s59
      %p66 = scmp.eq.s32.totalorder %s28, 1
      %p67 = por %p65, %p66
      %p68 = scmp.ne.s32.totalorder %s59, %s60
      %p69 = scmp.eq.s32.totalorder %s28, 0
      %p70 = por %p68, %p69
      %p71 = scmp.ne.s32.totalorder %s59, %s60
      %p72 = scmp.eq.s32.totalorder %s29, 1
      %p73 = por %p71, %p72
      %p75 = scmp.ne.s32.totalorder %s60, %s74
      %p76 = scmp.eq.s32.totalorder %s29, 0
      %p77 = por %p75, %p76
      %s79 = sadd.s32 %s78, 1
      %p82 = scmp.eq.s32.totalorder %s23, 1
      %p83 = scmp.ne.s32.totalorder %s78, %s80
      %p84 = scmp.eq.s32.totalorder %s23, 0
      %p85 = por %p83, %p84
      %p86 = scmp.ne.s32.totalorder %s78, %s80
      %p87 = scmp.eq.s32.totalorder %s28, 1
      %p88 = por %p86, %p87
      %p89 = scmp.ne.s32.totalorder %s80, %s81
      %p90 = scmp.eq.s32.totalorder %s28, 0
      %p91 = por %p89, %p90
      %p92 = scmp.ne.s32.totalorder %s80, %s81
      %p93 = scmp.eq.s32.totalorder %s29, 1
      %p94 = por %p92, %p93
      %p96 = scmp.ne.s32.totalorder %s81, %s95
      %p97 = scmp.eq.s32.totalorder %s29, 0
      %p98 = por %p96, %p97
      %s100 = sadd.s32 %s99, 1
      %p103 = scmp.eq.s32.totalorder %s23, 1
      %p104 = scmp.ne.s32.totalorder %s99, %s101
      %p105 = scmp.eq.s32.totalorder %s23, 0
      %p106 = por %p104, %p105
      %p107 = scmp.ne.s32.totalorder %s99, %s101
      %p108 = scmp.eq.s32.totalorder %s28, 1
      %p109 = por %p107, %p108
      %p110 = scmp.ne.s32.totalorder %s101, %s102
      %p111 = scmp.eq.s32.totalorder %s28, 0
      %p112 = por %p110, %p111
      %p113 = scmp.ne.s32.totalorder %s101, %s102
      %p114 = scmp.eq.s32.totalorder %s29, 1
      %p115 = por %p113, %p114
      %p117 = scmp.ne.s32.totalorder %s102, %s116
      %p118 = scmp.eq.s32.totalorder %s29, 0
      %p119 = por %p117, %p118
      %s121 = sadd.s32 %s120, 1
      %p124 = scmp.eq.s32.totalorder %s23, 1
      %p125 = scmp.ne.s32.totalorder %s120, %s122
      %p126 = scmp.eq.s32.totalorder %s23, 0
      %p127 = por %p125, %p126
      %p128 = scmp.ne.s32.totalorder %s120, %s122
      %p129 = scmp.eq.s32.totalorder %s28, 1
      %p130 = por %p128, %p129
      %p131 = scmp.ne.s32.totalorder %s122, %s123
      %p132 = scmp.eq.s32.totalorder %s28, 0
      %p133 = por %p131, %p132
      %p134 = scmp.ne.s32.totalorder %s122, %s123
      %p135 = scmp.eq.s32.totalorder %s29, 1
      %p136 = por %p134, %p135
      %p138 = scmp.ne.s32.totalorder %s123, %s137
      %p139 = scmp.eq.s32.totalorder %s29, 0
      %p140 = por %p138, %p139
      %s142 = sadd.s32 %s141, 1
      %p145 = scmp.eq.s32.totalorder %s23, 1
      %p146 = scmp.ne.s32.totalorder %s141, %s143
      %p147 = scmp.eq.s32.totalorder %s23, 0
      %p148 = por %p146, %p147
      %p149 = scmp.ne.s32.totalorder %s141, %s143
      %p150 = scmp.eq.s32.totalorder %s28, 1
      %p151 = por %p149, %p150
      %p152 = scmp.ne.s32.totalorder %s143, %s144
      %p153 = scmp.eq.s32.totalorder %s28, 0
      %p154 = por %p152, %p153
      %p155 = scmp.ne.s32.totalorder %s143, %s144
      %p156 = scmp.eq.s32.totalorder %s29, 1
      %p157 = por %p155, %p156
      %p159 = scmp.ne.s32.totalorder %s144, %s158
      %p160 = scmp.eq.s32.totalorder %s29, 0
      %p161 = por %p159, %p160
      %s163 = sadd.s32 %s162, 1
      %p166 = scmp.eq.s32.totalorder %s23, 1
      %p167 = scmp.ne.s32.totalorder %s162, %s164
      %p168 = scmp.eq.s32.totalorder %s23, 0
      %p169 = por %p167, %p168
      %p170 = scmp.ne.s32.totalorder %s162, %s164
      %p171 = scmp.eq.s32.totalorder %s28, 1
      %p172 = por %p170, %p171
      %p173 = scmp.ne.s32.totalorder %s164, %s165
      %p174 = scmp.eq.s32.totalorder %s28, 0
      %p175 = por %p173, %p174
      %p176 = scmp.ne.s32.totalorder %s164, %s165
      %p177 = scmp.eq.s32.totalorder %s29, 1
      %p178 = por %p176, %p177
      %p180 = scmp.ne.s32.totalorder %s165, %s179
      %p181 = scmp.eq.s32.totalorder %s29, 0
      %p182 = por %p180, %p181
      %s184 = sadd.s32 %s183, 1
      %p187 = scmp.eq.s32.totalorder %s23, 1
      %p188 = scmp.ne.s32.totalorder %s183, %s185
      %p189 = scmp.eq.s32.totalorder %s23, 0
      %p190 = por %p188, %p189
      %p191 = scmp.ne.s32.totalorder %s183, %s185
      %p192 = scmp.eq.s32.totalorder %s28, 1
      %p193 = por %p191, %p192
      %p194 = scmp.ne.s32.totalorder %s185, %s186
      %p195 = scmp.eq.s32.totalorder %s28, 0
      %p196 = por %p194, %p195
      %p197 = scmp.ne.s32.totalorder %s185, %s186
      %p198 = scmp.eq.s32.totalorder %s29, 1
      %p199 = por %p197, %p198
      %p201 = scmp.ne.s32.totalorder %s186, %s200
      %p202 = scmp.eq.s32.totalorder %s29, 0
      %p203 = por %p201, %p202
      %s205 = sadd.s32 %s204, 1
      %p208 = scmp.eq.s32.totalorder %s23, 1
      %p209 = scmp.ne.s32.totalorder %s204, %s206
      %p210 = scmp.eq.s32.totalorder %s23, 0
      %p211 = por %p209, %p210
      %p212 = scmp.ne.s32.totalorder %s204, %s206
      %p213 = scmp.eq.s32.totalorder %s28, 1
      %p214 = por %p212, %p213
      %p215 = scmp.ne.s32.totalorder %s206, %s207
      %p216 = scmp.eq.s32.totalorder %s28, 0
      %p217 = por %p215, %p216
      %p218 = scmp.ne.s32.totalorder %s206, %s207
      %p219 = scmp.eq.s32.totalorder %s29, 1
      %p220 = por %p218, %p219
      %p222 = scmp.ne.s32.totalorder %s207, %s221
      %p223 = scmp.eq.s32.totalorder %s29, 0
      %p224 = por %p222, %p223
      %s226 = sadd.s32 %s225, 1
      %p229 = scmp.eq.s32.totalorder %s23, 1
      %p230 = scmp.ne.s32.totalorder %s225, %s227
      %p231 = scmp.eq.s32.totalorder %s23, 0
      %p232 = por %p230, %p231
      %p233 = scmp.ne.s32.totalorder %s225, %s227
      %p234 = scmp.eq.s32.totalorder %s28, 1
      %p235 = por %p233, %p234
      %p236 = scmp.ne.s32.totalorder %s227, %s228
      %p237 = scmp.eq.s32.totalorder %s28, 0
      %p238 = por %p236, %p237
      %p239 = scmp.ne.s32.totalorder %s227, %s228
      %p240 = scmp.eq.s32.totalorder %s29, 1
      %p241 = por %p239, %p240
      %p243 = scmp.ne.s32.totalorder %s228, %s242
      %p244 = scmp.eq.s32.totalorder %s29, 0
      %p245 = por %p243, %p244
      %s247 = sadd.s32 %s246, 1
      %p250 = scmp.eq.s32.totalorder %s23, 1
      %p251 = scmp.ne.s32.totalorder %s246, %s248
      %p252 = scmp.eq.s32.totalorder %s23, 0
      %p253 = por %p251, %p252
      %p254 = scmp.ne.s32.totalorder %s246, %s248
      %p255 = scmp.eq.s32.totalorder %s28, 1
      %p256 = por %p254, %p255
      %p257 = scmp.ne.s32.totalorder %s248, %s249
      %p258 = scmp.eq.s32.totalorder %s28, 0
      %p259 = por %p257, %p258
      %p260 = scmp.ne.s32.totalorder %s248, %s249
      %p261 = scmp.eq.s32.totalorder %s29, 1
      %p262 = por %p260, %p261
      %p264 = scmp.ne.s32.totalorder %s249, %s263
      %p265 = scmp.eq.s32.totalorder %s29, 0
      %p266 = por %p264, %p265
      %s268 = sadd.s32 %s267, 1
      %p271 = scmp.eq.s32.totalorder %s23, 1
      %p272 = scmp.ne.s32.totalorder %s267, %s269
      %p273 = scmp.eq.s32.totalorder %s23, 0
      %p274 = por %p272, %p273
      %p275 = scmp.ne.s32.totalorder %s267, %s269
      %p276 = scmp.eq.s32.totalorder %s28, 1
      %p277 = por %p275, %p276
      %p278 = scmp.ne.s32.totalorder %s269, %s270
      %p279 = scmp.eq.s32.totalorder %s28, 0
      %p280 = por %p278, %p279
      %p281 = scmp.ne.s32.totalorder %s269, %s270
      %p282 = scmp.eq.s32.totalorder %s29, 1
      %p283 = por %p281, %p282
      %p285 = scmp.ne.s32.totalorder %s270, %s284
      %p286 = scmp.eq.s32.totalorder %s29, 0
      %p287 = por %p285, %p286
      %s288 = ssub.s32 %s23, %s30
      %p289 = scmp.eq.s32.totalorder %s288, 0
      %s291 = sadd.s32 %s290, 1
      %s292 = scalar_select %p289, %s290, %s291
      %p295 = pneg %p289
      %p296 = scmp.eq.s32.totalorder %s23, 1
      %p297 = por %p295, %p296
      %p298 = scmp.ne.s32.totalorder %s290, %s293
      %p299 = scmp.eq.s32.totalorder %s23, 0
      %p300 = por %p298, %p299
      %p301 = scmp.ne.s32.totalorder %s290, %s293
      %p302 = scmp.eq.s32.totalorder %s28, 1
      %p303 = por %p301, %p302
      %p304 = scmp.ne.s32.totalorder %s293, %s294
      %p305 = scmp.eq.s32.totalorder %s28, 0
      %p306 = por %p304, %p305
      %p307 = scmp.ne.s32.totalorder %s293, %s294
      %p308 = scmp.eq.s32.totalorder %s29, 1
      %p309 = por %p307, %p308
      %p311 = scmp.ne.s32.totalorder %s294, %s310
      %p312 = scmp.eq.s32.totalorder %s29, 0
      %p313 = por %p311, %p312
      %p314 = scmp.le.s32.totalorder 1, %s23
      %p315 = scmp.lt.s32.totalorder %s23, 3
      %p316 = pnand %p314, %p315
      %p317 = pneg %p316
      // Predicated region
      $region9: #{tpu_custom_call.1} parent=5 // pred_check
        _
      $region10: #{tpu_custom_call.1} parent=5 // pred_check_branch
        %319 = sbr.rel (%p316) target = $region12
      $region11: #{tpu_custom_call.1} parent=5 // pred_region
        %s320 = ssub.s32 %s23, 1
        // Predicated region
        $region13: #{tpu_custom_call.1} parent=11 // pred_check
          %p321 = pneg %p70
        $region14: #{tpu_custom_call.1} parent=11 // pred_check_branch
          %323 = sbr.rel (%p321) target = $region16
        $region15: #{tpu_custom_call.1} parent=11 // pred_region
          %s325 = ssub.s32 2048, 2048
          %326 = vsyncadd [#allocation3], %s325
          %s327 = sshll.u32 [#allocation2], 4
          %s328 = int_to_ptr.vmem [resolvable:$true] %s327
          %333 = dma.hbm_to_vmem [thread:$0]  %s1, 2048, %s328, [#allocation3], 256, 256, 16
        $region16: #{tpu_custom_call.1} parent=11 // pred_fallthru
          _
        // Predicated region
        $region17: #{tpu_custom_call.1} parent=11 // pred_check
          %p334 = pneg %p91
        $region18: #{tpu_custom_call.1} parent=11 // pred_check_branch
          %336 = sbr.rel (%p334) target = $region20
        $region19: #{tpu_custom_call.1} parent=11 // pred_region
          _
        $region20: #{tpu_custom_call.1} parent=11 // pred_fallthru
          _
        // Predicated region
        $region21: #{tpu_custom_call.1} parent=11 // pred_check
          %p337 = pneg %p112
        $region22: #{tpu_custom_call.1} parent=11 // pred_check_branch
          %339 = sbr.rel (%p337) target = $region24
        $region23: #{tpu_custom_call.1} parent=11 // pred_region
          _
        $region24: #{tpu_custom_call.1} parent=11 // pred_fallthru
          _
        // Predicated region
        $region25: #{tpu_custom_call.1} parent=11 // pred_check
          %p340 = pneg %p133
        $region26: #{tpu_custom_call.1} parent=11 // pred_check_branch
          %342 = sbr.rel (%p340) target = $region28
        $region27: #{tpu_custom_call.1} parent=11 // pred_region
          %s344 = ssub.s32 4096, 4096
          %345 = vsyncadd [#allocation6], %s344
          %s346 = sshll.u32 [#allocation5], 4
          %s347 = int_to_ptr.vmem [resolvable:$true] %s346
          %352 = dma.hbm_to_vmem [thread:$0]  %s4, 4096, %s347, [#allocation6], 64, 64, 4
        $region28: #{tpu_custom_call.1} parent=11 // pred_fallthru
          _
        // Predicated region
        $region29: #{tpu_custom_call.1} parent=11 // pred_check
          %p353 = pneg %p154
        $region30: #{tpu_custom_call.1} parent=11 // pred_check_branch
          %355 = sbr.rel (%p353) target = $region32
        $region31: #{tpu_custom_call.1} parent=11 // pred_region
          _
        $region32: #{tpu_custom_call.1} parent=11 // pred_fallthru
          _
        // Predicated region
        $region33: #{tpu_custom_call.1} parent=11 // pred_check
          %p356 = pneg %p175
        $region34: #{tpu_custom_call.1} parent=11 // pred_check_branch
          %358 = sbr.rel (%p356) target = $region36
        $region35: #{tpu_custom_call.1} parent=11 // pred_region
          _
        $region36: #{tpu_custom_call.1} parent=11 // pred_fallthru
          _
        // Predicated region
        $region37: #{tpu_custom_call.1} parent=11 // pred_check
          %p359 = pneg %p196
        $region38: #{tpu_custom_call.1} parent=11 // pred_check_branch
          %361 = sbr.rel (%p359) target = $region40
        $region39: #{tpu_custom_call.1} parent=11 // pred_region
          _
        $region40: #{tpu_custom_call.1} parent=11 // pred_fallthru
          _
        // Predicated region
        $region41: #{tpu_custom_call.1} parent=11 // pred_check
          %p362 = pneg %p217
        $region42: #{tpu_custom_call.1} parent=11 // pred_check_branch
          %364 = sbr.rel (%p362) target = $region44
        $region43: #{tpu_custom_call.1} parent=11 // pred_region
          _
        $region44: #{tpu_custom_call.1} parent=11 // pred_fallthru
          _
        // Predicated region
        $region45: #{tpu_custom_call.1} parent=11 // pred_check
          %p365 = pneg %p238
        $region46: #{tpu_custom_call.1} parent=11 // pred_check_branch
          %367 = sbr.rel (%p365) target = $region48
        $region47: #{tpu_custom_call.1} parent=11 // pred_region
          _
        $region48: #{tpu_custom_call.1} parent=11 // pred_fallthru
          _
        // Predicated region
        $region49: #{tpu_custom_call.1} parent=11 // pred_check
          %p368 = pneg %p259
        $region50: #{tpu_custom_call.1} parent=11 // pred_check_branch
          %370 = sbr.rel (%p368) target = $region52
        $region51: #{tpu_custom_call.1} parent=11 // pred_region
          _
        $region52: #{tpu_custom_call.1} parent=11 // pred_fallthru
          _
        // Predicated region
        $region53: #{tpu_custom_call.1} parent=11 // pred_check
          %p371 = pneg %p280
        $region54: #{tpu_custom_call.1} parent=11 // pred_check_branch
          %373 = sbr.rel (%p371) target = $region56
        $region55: #{tpu_custom_call.1} parent=11 // pred_region
          _
        $region56: #{tpu_custom_call.1} parent=11 // pred_fallthru
          _
      $region12: #{tpu_custom_call.1} parent=5 // pred_fallthru
        _
      %p374 = scmp.lt.s32.totalorder %s23, 2
      // Predicated region
      $region57: #{tpu_custom_call.1} parent=5 // pred_check
        %p375 = pneg %p374
      $region58: #{tpu_custom_call.1} parent=5 // pred_check_branch
        %377 = sbr.rel (%p375) target = $region60
      $region59: #{tpu_custom_call.1} parent=5 // pred_region
        // Predicated region
        $region61: #{tpu_custom_call.1} parent=59 // pred_check
          %p378 = pneg %p43
        $region62: #{tpu_custom_call.1} parent=59 // pred_check_branch
          %380 = sbr.rel (%p378) target = $region64
        $region63: #{tpu_custom_call.1} parent=59 // pred_region
          %p381 = scmp.lt.s32.totalorder %s23, 1
          %s382 = scalar_select %p381, %s23, 1
          %s383 = smul.addr %s382, 4
          %s384 = scalar_lea.vmem %s0, %s383
        $region64: #{tpu_custom_call.1} parent=59 // pred_fallthru
          _
      $region60: #{tpu_custom_call.1} parent=5 // pred_fallthru
        _
      %p385 = scmp.le.s32.totalorder 1, %s23
      %p386 = scmp.lt.s32.totalorder %s23, 3
      %p387 = pnand %p385, %p386
      %p388 = pneg %p387
      // Predicated region
      $region65: #{tpu_custom_call.1} parent=5 // pred_check
        _
      $region66: #{tpu_custom_call.1} parent=5 // pred_check_branch
        %390 = sbr.rel (%p387) target = $region68
      $region67: #{tpu_custom_call.1} parent=5 // pred_region
        %s391 = ssub.s32 %s23, 1
        // Predicated region
        $region69: #{tpu_custom_call.1} parent=67 // pred_check
          %p392 = pneg %p70
        $region70: #{tpu_custom_call.1} parent=67 // pred_check_branch
          %394 = sbr.rel (%p392) target = $region72
        $region71: #{tpu_custom_call.1} parent=67 // pred_region
          %395 = dma.done [#allocation3], 2048
        $region72: #{tpu_custom_call.1} parent=67 // pred_fallthru
          _
        // Predicated region
        $region73: #{tpu_custom_call.1} parent=67 // pred_check
          %p396 = pneg %p133
        $region74: #{tpu_custom_call.1} parent=67 // pred_check_branch
          %398 = sbr.rel (%p396) target = $region76
        $region75: #{tpu_custom_call.1} parent=67 // pred_region
          %399 = dma.done [#allocation6], 4096
        $region76: #{tpu_custom_call.1} parent=67 // pred_fallthru
          _
        %p400 = scmp.lt.s32.totalorder %s28, 1
        %s401 = scalar_select %p400, %s28, 1
        %s402 = smul.addr %s401, 4
        %s403 = scalar_lea.vmem %s0, %s402
        %p404 = pneg %p49
        %p405 = pneg %p46
        %p406 = pneg %p70
        %p407 = pneg %p67
        %p408 = pneg %p91
        %p409 = pneg %p88
        %p410 = pneg %p112
        %p411 = pneg %p109
        %p412 = pneg %p133
        %p413 = pneg %p130
        %p414 = pneg %p154
        %p415 = pneg %p151
        %p416 = pneg %p175
        %p417 = pneg %p172
        %p418 = pneg %p196
        %p419 = pneg %p193
        %p420 = pneg %p217
        %p421 = pneg %p214
        %p422 = pneg %p238
        %p423 = pneg %p235
        %p424 = pneg %p259
        %p425 = pneg %p256
        %p426 = pneg %p280
        %p427 = pneg %p277
        %p428 = pneg %p306
        %p429 = pneg %p303
        %s430 = sand.u32 %s293, 1
        %s431 = scalar_lea.sflag [#allocation4], %s430
        %s432 = sand.u32 %s293, 1
        %s433 = smul.addr %s432, 8
        %s434 = scalar_lea.vmem [#allocation7], %s433
        %p435 = scmp.lt.s32.totalorder %s28, 1
        %s436 = scalar_select %p435, %s28, 1
        %s437 = smul.addr %s436, 4
        %s438 = scalar_lea.vmem %s0, %s437
        %v440 = vld [vmem:[%s438] sm:$0xf]
        %v441 = vld [vmem:[#allocation2] sm:$0xff]
        %v442 = vld [vmem:[#allocation2 + $0x8] sm:$0xff]
        %v443 = vld [vmem:[#allocation2 + $0x10] sm:$0xff]
        %v444 = vld [vmem:[#allocation2 + $0x18] sm:$0xff]
        %v445 = vld [vmem:[#allocation2 + $0x20] sm:$0xff]
        %v446 = vld [vmem:[#allocation2 + $0x28] sm:$0xff]
        %v447 = vld [vmem:[#allocation2 + $0x30] sm:$0xff]
        %v448 = vld [vmem:[#allocation2 + $0x38] sm:$0xff]
        %v449 = vld [vmem:[#allocation2 + $0x40] sm:$0xff]
        %v450 = vld [vmem:[#allocation2 + $0x48] sm:$0xff]
        %v451 = vld [vmem:[#allocation2 + $0x50] sm:$0xff]
        %v452 = vld [vmem:[#allocation2 + $0x58] sm:$0xff]
        %v453 = vld [vmem:[#allocation2 + $0x60] sm:$0xff]
        %v454 = vld [vmem:[#allocation2 + $0x68] sm:$0xff]
        %v455 = vld [vmem:[#allocation2 + $0x70] sm:$0xff]
        %v456 = vld [vmem:[#allocation2 + $0x78] sm:$0xff]
        %v473 = vunpack.c.l.b16 %v441
        %v474 = vunpack.c.h.b16 %v441
        %v475 = vunpack.c.l.b16 %v442
        %v476 = vunpack.c.h.b16 %v442
        %v477 = vunpack.c.l.b16 %v443
        %v478 = vunpack.c.h.b16 %v443
        %v479 = vunpack.c.l.b16 %v444
        %v480 = vunpack.c.h.b16 %v444
        %v481 = vunpack.c.l.b16 %v445
        %v482 = vunpack.c.h.b16 %v445
        %v483 = vunpack.c.l.b16 %v446
        %v484 = vunpack.c.h.b16 %v446
        %v485 = vunpack.c.l.b16 %v447
        %v486 = vunpack.c.h.b16 %v447
        %v487 = vunpack.c.l.b16 %v448
        %v488 = vunpack.c.h.b16 %v448
        %v489 = vunpack.c.l.b16 %v449
        %v490 = vunpack.c.h.b16 %v449
        %v491 = vunpack.c.l.b16 %v450
        %v492 = vunpack.c.h.b16 %v450
        %v493 = vunpack.c.l.b16 %v451
        %v494 = vunpack.c.h.b16 %v451
        %v495 = vunpack.c.l.b16 %v452
        %v496 = vunpack.c.h.b16 %v452
        %v497 = vunpack.c.l.b16 %v453
        %v498 = vunpack.c.h.b16 %v453
        %v499 = vunpack.c.l.b16 %v454
        %v500 = vunpack.c.h.b16 %v454
        %v501 = vunpack.c.l.b16 %v455
        %v502 = vunpack.c.h.b16 %v455
        %v503 = vunpack.c.l.b16 %v456
        %v504 = vunpack.c.h.b16 %v456
        %v505 = vpack.c.b16 %v477, %v473
        %v506 = vpack.c.b16 %v478, %v474
        %v507 = vpack.c.b16 %v479, %v475
        %v508 = vpack.c.b16 %v480, %v476
        %v509 = vpack.c.b16 %v485, %v481
        %v510 = vpack.c.b16 %v486, %v482
        %v511 = vpack.c.b16 %v487, %v483
        %v512 = vpack.c.b16 %v488, %v484
        %v513 = vpack.c.b16 %v493, %v489
        %v514 = vpack.c.b16 %v494, %v490
        %v515 = vpack.c.b16 %v495, %v491
        %v516 = vpack.c.b16 %v496, %v492
        %v517 = vpack.c.b16 %v501, %v497
        %v518 = vpack.c.b16 %v502, %v498
        %v519 = vpack.c.b16 %v503, %v499
        %v520 = vpack.c.b16 %v504, %v500
        %vm537 = vcmask 523264
        %v539 = vsel %vm537, %v440, 0
        %541 = vmatprep.subr.bf16.mxu0 %v506
        %542 = vmatpush1.bf16.msra.mxu0 %v505
        %543 = vmatprep.subr.bf16.mxu0 %v510
        %544 = vmatpush1.bf16.msra.mxu0 %v509
        %545 = vmatprep.subr.bf16.mxu0 %v514
        %546 = vmatpush1.bf16.msra.mxu0 %v513
        %547 = vmatprep.subr.bf16.mxu0 %v518
        %548 = vmatpush1.bf16.msra.mxu0 %v517
        %549 = vmatprep.subr.bf16.mxu0 0
        %550 = vmatpush1.bf16.msra.mxu0 0
        %551 = vmatprep.subr.bf16.mxu0 0
        %552 = vmatpush1.bf16.msra.mxu0 0
        %553 = vmatprep.subr.bf16.mxu0 0
        %554 = vmatpush1.bf16.msra.mxu0 0
        %555 = vmatprep.subr.bf16.mxu0 0
        %556 = vmatpush1.bf16.msra.mxu0 0
        %557 = vmatprep.subr.bf16.mxu0 0
        %558 = vmatpush1.bf16.msra.mxu0 0
        %559 = vmatprep.subr.bf16.mxu0 0
        %560 = vmatpush1.bf16.msra.mxu0 0
        %561 = vmatprep.subr.bf16.mxu0 0
        %562 = vmatpush1.bf16.msra.mxu0 0
        %563 = vmatprep.subr.bf16.mxu0 0
        %564 = vmatpush1.bf16.msra.mxu0 0
        %565 = vmatprep.subr.bf16.mxu0 0
        %566 = vmatpush1.bf16.msra.mxu0 0
        %567 = vmatprep.subr.bf16.mxu0 0
        %568 = vmatpush1.bf16.msra.mxu0 0
        %569 = vmatprep.subr.bf16.mxu0 0
        %570 = vmatpush1.bf16.msra.mxu0 0
        %571 = vmatprep.subr.bf16.mxu0 0
        %572 = vmatpush1.bf16.msra.mxu0 0
        %573 = vmatprep.mubr.bf16.mxu0 0
        %574 = vmatmul.mubr.bf16.gmra.mrb[0].mxu0 %v539
        %v575 = vpop.f32.mrb[0].mxu0
        %v576 = vadd.f32 0.0, %v575
        %v577 = vpop.f32.mrb[0].mxu0
        %v578 = vadd.f32 0.0, %v577
        %v579 = vpop.f32.mrb[0].mxu0
        %v580 = vpop.f32.mrb[0].mxu0
        %581 = vdwg.mxu0
        %582 = vmatprep.subr.bf16.mxu0 %v508
        %583 = vmatpush1.bf16.msra.mxu0 %v507
        %584 = vmatprep.subr.bf16.mxu0 %v512
        %585 = vmatpush1.bf16.msra.mxu0 %v511
        %586 = vmatprep.subr.bf16.mxu0 %v516
        %587 = vmatpush1.bf16.msra.mxu0 %v515
        %588 = vmatprep.subr.bf16.mxu0 %v520
        %589 = vmatpush1.bf16.msra.mxu0 %v519
        %590 = vmatprep.subr.bf16.mxu0 0
        %591 = vmatpush1.bf16.msra.mxu0 0
        %592 = vmatprep.subr.bf16.mxu0 0
        %593 = vmatpush1.bf16.msra.mxu0 0
        %594 = vmatprep.subr.bf16.mxu0 0
        %595 = vmatpush1.bf16.msra.mxu0 0
        %596 = vmatprep.subr.bf16.mxu0 0
        %597 = vmatpush1.bf16.msra.mxu0 0
        %598 = vmatprep.subr.bf16.mxu0 0
        %599 = vmatpush1.bf16.msra.mxu0 0
        %600 = vmatprep.subr.bf16.mxu0 0
        %601 = vmatpush1.bf16.msra.mxu0 0
        %602 = vmatprep.subr.bf16.mxu0 0
        %603 = vmatpush1.bf16.msra.mxu0 0
        %604 = vmatprep.subr.bf16.mxu0 0
        %605 = vmatpush1.bf16.msra.mxu0 0
        %606 = vmatprep.subr.bf16.mxu0 0
        %607 = vmatpush1.bf16.msra.mxu0 0
        %608 = vmatprep.subr.bf16.mxu0 0
        %609 = vmatpush1.bf16.msra.mxu0 0
        %610 = vmatprep.subr.bf16.mxu0 0
        %611 = vmatpush1.bf16.msra.mxu0 0
        %612 = vmatprep.subr.bf16.mxu0 0
        %613 = vmatpush1.bf16.msra.mxu0 0
        %614 = vmatprep.mubr.bf16.mxu0 0
        %615 = vmatmul.mubr.bf16.gmra.mrb[0].mxu0 %v539
        %v616 = vpop.f32.mrb[0].mxu0
        %v617 = vadd.f32 0.0, %v616
        %v618 = vpop.f32.mrb[0].mxu0
        %v619 = vadd.f32 0.0, %v618
        %v620 = vpop.f32.mrb[0].mxu0
        %v621 = vpop.f32.mrb[0].mxu0
        %622 = vdwg.mxu0
        %v623 = vld [vmem:[%s2] sm:$0xf]
        %v624 = vld [vmem:[%s3] sm:$0xf]
        %v625 = vadd.f32 %v576, %v578
        %v626 = vadd.f32 %v625, %v617
        %v627 = vadd.f32 %v626, %v619
        %628 = vadd.xlane.f32.xlu0 %v627
        %v629 = vpop.xlane.xlu0 %628
        %v630 = vrcp.pop 512.0
        %v631 = vmul.f32 %v629, %v630
        %v632 = vsub.f32 %v576, %v631
        %v633 = vsub.f32 %v578, %v631
        %v634 = vsub.f32 %v617, %v631
        %v635 = vsub.f32 %v619, %v631
        %v636 = vmul.f32 %v632, %v632
        %v637 = vmul.f32 %v633, %v633
        %v638 = vmul.f32 %v634, %v634
        %v639 = vmul.f32 %v635, %v635
        %v640 = vadd.f32 %v636, %v637
        %v641 = vadd.f32 %v640, %v638
        %v642 = vadd.f32 %v641, %v639
        %643 = vadd.xlane.f32.xlu0 %v642
        %v644 = vpop.xlane.xlu0 %643
        %v645 = vmul.f32 %v644, %v630
        %v646 = vadd.f32 %v645, 1e-05
        %v647 = vrsqrt.pop %v646
        %v648 = vmul.f32 %v632, %v647
        %v649 = vmul.f32 %v633, %v647
        %v650 = vmul.f32 %v634, %v647
        %v651 = vmul.f32 %v635, %v647
        %v653 = vlaneseq
        %v654 = vshrl.u32 %v653, 7
        %v655 = vsub.s32 0, %v654
        %v656 = vrot.slane %v623, %v655
        %v657 = vlaneseq
        %v658 = vshrl.u32 %v657, 7
        %v659 = vsub.s32 1, %v658
        %v660 = vrot.slane %v623, %v659
        %v661 = vlaneseq
        %v662 = vshrl.u32 %v661, 7
        %v663 = vsub.s32 2, %v662
        %v664 = vrot.slane %v623, %v663
        %v665 = vlaneseq
        %v666 = vshrl.u32 %v665, 7
        %v667 = vsub.s32 3, %v666
        %v668 = vrot.slane %v623, %v667
        %v673 = vmul.f32 %v648, %v656
        %v674 = vmul.f32 %v649, %v660
        %v675 = vmul.f32 %v650, %v664
        %v676 = vmul.f32 %v651, %v668
        %v678 = vlaneseq
        %v679 = vshrl.u32 %v678, 7
        %v680 = vsub.s32 0, %v679
        %v681 = vrot.slane %v624, %v680
        %v682 = vlaneseq
        %v683 = vshrl.u32 %v682, 7
        %v684 = vsub.s32 1, %v683
        %v685 = vrot.slane %v624, %v684
        %v686 = vlaneseq
        %v687 = vshrl.u32 %v686, 7
        %v688 = vsub.s32 2, %v687
        %v689 = vrot.slane %v624, %v688
        %v690 = vlaneseq
        %v691 = vshrl.u32 %v690, 7
        %v692 = vsub.s32 3, %v691
        %v693 = vrot.slane %v624, %v692
        %v698 = vadd.f32 %v673, %v681
        %v699 = vadd.f32 %v674, %v685
        %v700 = vadd.f32 %v675, %v689
        %v701 = vadd.f32 %v676, %v693
        %vm702 = vcmp.gt.f32.partialorder %v698, 0.0
        %vm703 = vcmp.gt.f32.partialorder %v699, 0.0
        %vm704 = vcmp.gt.f32.partialorder %v700, 0.0
        %vm705 = vcmp.gt.f32.partialorder %v701, 0.0
        %v706 = vmul.f32 %v698, 0.2
        %v707 = vmul.f32 %v699, 0.2
        %v708 = vmul.f32 %v700, 0.2
        %v709 = vmul.f32 %v701, 0.2
        %v710 = vsel %vm702, %v698, %v706
        %v711 = vsel %vm703, %v699, %v707
        %v712 = vsel %vm704, %v700, %v708
        %v713 = vsel %vm705, %v701, %v709
        %v714 = vpack.c.bf16 %v710, %v710
        %v715 = vpack.c.bf16 %v711, %v711
        %v716 = vpack.c.bf16 %v712, %v712
        %v717 = vpack.c.bf16 %v713, %v713
        %v718 = vld [vmem:[#allocation5] sm:$0xf]
        %v719 = vld [vmem:[#allocation5 + $0x4] sm:$0xf]
        %v720 = vld [vmem:[#allocation5 + $0x8] sm:$0xf]
        %v721 = vld [vmem:[#allocation5 + $0xc] sm:$0xf]
        %v722 = vld [vmem:[#allocation5 + $0x10] sm:$0xf]
        %v723 = vld [vmem:[#allocation5 + $0x14] sm:$0xf]
        %v724 = vld [vmem:[#allocation5 + $0x18] sm:$0xf]
        %v725 = vld [vmem:[#allocation5 + $0x1c] sm:$0xf]
        %v726 = vld [vmem:[#allocation5 + $0x20] sm:$0xf]
        %v727 = vld [vmem:[#allocation5 + $0x24] sm:$0xf]
        %v728 = vld [vmem:[#allocation5 + $0x28] sm:$0xf]
        %v729 = vld [vmem:[#allocation5 + $0x2c] sm:$0xf]
        %v730 = vld [vmem:[#allocation5 + $0x30] sm:$0xf]
        %v731 = vld [vmem:[#allocation5 + $0x34] sm:$0xf]
        %v732 = vld [vmem:[#allocation5 + $0x38] sm:$0xf]
        %v733 = vld [vmem:[#allocation5 + $0x3c] sm:$0xf]
        %v734 = vld [vmem:[#allocation5 + $0x40] sm:$0xf]
        %v735 = vld [vmem:[#allocation5 + $0x44] sm:$0xf]
        %v736 = vld [vmem:[#allocation5 + $0x48] sm:$0xf]
        %v737 = vld [vmem:[#allocation5 + $0x4c] sm:$0xf]
        %v738 = vld [vmem:[#allocation5 + $0x50] sm:$0xf]
        %v739 = vld [vmem:[#allocation5 + $0x54] sm:$0xf]
        %v740 = vld [vmem:[#allocation5 + $0x58] sm:$0xf]
        %v741 = vld [vmem:[#allocation5 + $0x5c] sm:$0xf]
        %v742 = vld [vmem:[#allocation5 + $0x60] sm:$0xf]
        %v743 = vld [vmem:[#allocation5 + $0x64] sm:$0xf]
        %v744 = vld [vmem:[#allocation5 + $0x68] sm:$0xf]
        %v745 = vld [vmem:[#allocation5 + $0x6c] sm:$0xf]
        %v746 = vld [vmem:[#allocation5 + $0x70] sm:$0xf]
        %v747 = vld [vmem:[#allocation5 + $0x74] sm:$0xf]
        %v748 = vld [vmem:[#allocation5 + $0x78] sm:$0xf]
        %v749 = vld [vmem:[#allocation5 + $0x7c] sm:$0xf]
        %v750 = vld [vmem:[#allocation5 + $0x80] sm:$0xf]
        %v751 = vld [vmem:[#allocation5 + $0x84] sm:$0xf]
        %v752 = vld [vmem:[#allocation5 + $0x88] sm:$0xf]
        %v753 = vld [vmem:[#allocation5 + $0x8c] sm:$0xf]
        %v754 = vld [vmem:[#allocation5 + $0x90] sm:$0xf]
        %v755 = vld [vmem:[#allocation5 + $0x94] sm:$0xf]
        %v756 = vld [vmem:[#allocation5 + $0x98] sm:$0xf]
        %v757 = vld [vmem:[#allocation5 + $0x9c] sm:$0xf]
        %v758 = vld [vmem:[#allocation5 + $0xa0] sm:$0xf]
        %v759 = vld [vmem:[#allocation5 + $0xa4] sm:$0xf]
        %v760 = vld [vmem:[#allocation5 + $0xa8] sm:$0xf]
        %v761 = vld [vmem:[#allocation5 + $0xac] sm:$0xf]
        %v762 = vld [vmem:[#allocation5 + $0xb0] sm:$0xf]
        %v763 = vld [vmem:[#allocation5 + $0xb4] sm:$0xf]
        %v764 = vld [vmem:[#allocation5 + $0xb8] sm:$0xf]
        %v765 = vld [vmem:[#allocation5 + $0xbc] sm:$0xf]
        %v766 = vld [vmem:[#allocation5 + $0xc0] sm:$0xf]
        %v767 = vld [vmem:[#allocation5 + $0xc4] sm:$0xf]
        %v768 = vld [vmem:[#allocation5 + $0xc8] sm:$0xf]
        %v769 = vld [vmem:[#allocation5 + $0xcc] sm:$0xf]
        %v770 = vld [vmem:[#allocation5 + $0xd0] sm:$0xf]
        %v771 = vld [vmem:[#allocation5 + $0xd4] sm:$0xf]
        %v772 = vld [vmem:[#allocation5 + $0xd8] sm:$0xf]
        %v773 = vld [vmem:[#allocation5 + $0xdc] sm:$0xf]
        %v774 = vld [vmem:[#allocation5 + $0xe0] sm:$0xf]
        %v775 = vld [vmem:[#allocation5 + $0xe4] sm:$0xf]
        %v776 = vld [vmem:[#allocation5 + $0xe8] sm:$0xf]
        %v777 = vld [vmem:[#allocation5 + $0xec] sm:$0xf]
        %v778 = vld [vmem:[#allocation5 + $0xf0] sm:$0xf]
        %v779 = vld [vmem:[#allocation5 + $0xf4] sm:$0xf]
        %v780 = vld [vmem:[#allocation5 + $0xf8] sm:$0xf]
        %v781 = vld [vmem:[#allocation5 + $0xfc] sm:$0xf]
        %v846 = vunpack.c.l.b16 %v718
        %v847 = vunpack.c.l.b16 %v719
        %v848 = vunpack.c.l.b16 %v720
        %v849 = vunpack.c.l.b16 %v721
        %v850 = vunpack.c.l.b16 %v722
        %v851 = vunpack.c.l.b16 %v723
        %v852 = vunpack.c.l.b16 %v724
        %v853 = vunpack.c.l.b16 %v725
        %v854 = vunpack.c.l.b16 %v726
        %v855 = vunpack.c.l.b16 %v727
        %v856 = vunpack.c.l.b16 %v728
        %v857 = vunpack.c.l.b16 %v729
        %v858 = vunpack.c.l.b16 %v730
        %v859 = vunpack.c.l.b16 %v731
        %v860 = vunpack.c.l.b16 %v732
        %v861 = vunpack.c.l.b16 %v733
        %v862 = vunpack.c.l.b16 %v734
        %v863 = vunpack.c.l.b16 %v735
        %v864 = vunpack.c.l.b16 %v736
        %v865 = vunpack.c.l.b16 %v737
        %v866 = vunpack.c.l.b16 %v738
        %v867 = vunpack.c.l.b16 %v739
        %v868 = vunpack.c.l.b16 %v740
        %v869 = vunpack.c.l.b16 %v741
        %v870 = vunpack.c.l.b16 %v742
        %v871 = vunpack.c.l.b16 %v743
        %v872 = vunpack.c.l.b16 %v744
        %v873 = vunpack.c.l.b16 %v745
        %v874 = vunpack.c.l.b16 %v746
        %v875 = vunpack.c.l.b16 %v747
        %v876 = vunpack.c.l.b16 %v748
        %v877 = vunpack.c.l.b16 %v749
        %v878 = vunpack.c.l.b16 %v750
        %v879 = vunpack.c.l.b16 %v751
        %v880 = vunpack.c.l.b16 %v752
        %v881 = vunpack.c.l.b16 %v753
        %v882 = vunpack.c.l.b16 %v754
        %v883 = vunpack.c.l.b16 %v755
        %v884 = vunpack.c.l.b16 %v756
        %v885 = vunpack.c.l.b16 %v757
        %v886 = vunpack.c.l.b16 %v758
        %v887 = vunpack.c.l.b16 %v759
        %v888 = vunpack.c.l.b16 %v760
        %v889 = vunpack.c.l.b16 %v761
        %v890 = vunpack.c.l.b16 %v762
        %v891 = vunpack.c.l.b16 %v763
        %v892 = vunpack.c.l.b16 %v764
        %v893 = vunpack.c.l.b16 %v765
        %v894 = vunpack.c.l.b16 %v766
        %v895 = vunpack.c.l.b16 %v767
        %v896 = vunpack.c.l.b16 %v768
        %v897 = vunpack.c.l.b16 %v769
        %v898 = vunpack.c.l.b16 %v770
        %v899 = vunpack.c.l.b16 %v771
        %v900 = vunpack.c.l.b16 %v772
        %v901 = vunpack.c.l.b16 %v773
        %v902 = vunpack.c.l.b16 %v774
        %v903 = vunpack.c.l.b16 %v775
        %v904 = vunpack.c.l.b16 %v776
        %v905 = vunpack.c.l.b16 %v777
        %v906 = vunpack.c.l.b16 %v778
        %v907 = vunpack.c.l.b16 %v779
        %v908 = vunpack.c.l.b16 %v780
        %v909 = vunpack.c.l.b16 %v781
        %v910 = vpack.c.b16 %v847, %v846
        %v911 = vpack.c.b16 %v849, %v848
        %v912 = vpack.c.b16 %v851, %v850
        %v913 = vpack.c.b16 %v853, %v852
        %v914 = vpack.c.b16 %v855, %v854
        %v915 = vpack.c.b16 %v857, %v856
        %v916 = vpack.c.b16 %v859, %v858
        %v917 = vpack.c.b16 %v861, %v860
        %v918 = vpack.c.b16 %v863, %v862
        %v919 = vpack.c.b16 %v865, %v864
        %v920 = vpack.c.b16 %v867, %v866
        %v921 = vpack.c.b16 %v869, %v868
        %v922 = vpack.c.b16 %v871, %v870
        %v923 = vpack.c.b16 %v873, %v872
        %v924 = vpack.c.b16 %v875, %v874
        %v925 = vpack.c.b16 %v877, %v876
        %v926 = vpack.c.b16 %v879, %v878
        %v927 = vpack.c.b16 %v881, %v880
        %v928 = vpack.c.b16 %v883, %v882
        %v929 = vpack.c.b16 %v885, %v884
        %v930 = vpack.c.b16 %v887, %v886
        %v931 = vpack.c.b16 %v889, %v888
        %v932 = vpack.c.b16 %v891, %v890
        %v933 = vpack.c.b16 %v893, %v892
        %v934 = vpack.c.b16 %v895, %v894
        %v935 = vpack.c.b16 %v897, %v896
        %v936 = vpack.c.b16 %v899, %v898
        %v937 = vpack.c.b16 %v901, %v900
        %v938 = vpack.c.b16 %v903, %v902
        %v939 = vpack.c.b16 %v905, %v904
        %v940 = vpack.c.b16 %v907, %v906
        %v941 = vpack.c.b16 %v909, %v908
        %974 = vmatprep.subr.bf16.mxu0 0
        %975 = vmatpush1.bf16.msra.mxu0 %v910
        %976 = vmatprep.subr.bf16.mxu0 0
        %977 = vmatpush1.bf16.msra.mxu0 %v911
        %978 = vmatprep.subr.bf16.mxu0 0
        %979 = vmatpush1.bf16.msra.mxu0 %v912
        %980 = vmatprep.subr.bf16.mxu0 0
        %981 = vmatpush1.bf16.msra.mxu0 %v913
        %982 = vmatprep.subr.bf16.mxu0 0
        %983 = vmatpush1.bf16.msra.mxu0 %v914
        %984 = vmatprep.subr.bf16.mxu0 0
        %985 = vmatpush1.bf16.msra.mxu0 %v915
        %986 = vmatprep.subr.bf16.mxu0 0
        %987 = vmatpush1.bf16.msra.mxu0 %v916
        %988 = vmatprep.subr.bf16.mxu0 0
        %989 = vmatpush1.bf16.msra.mxu0 %v917
        %990 = vmatprep.subr.bf16.mxu0 0
        %991 = vmatpush1.bf16.msra.mxu0 %v918
        %992 = vmatprep.subr.bf16.mxu0 0
        %993 = vmatpush1.bf16.msra.mxu0 %v919
        %994 = vmatprep.subr.bf16.mxu0 0
        %995 = vmatpush1.bf16.msra.mxu0 %v920
        %996 = vmatprep.subr.bf16.mxu0 0
        %997 = vmatpush1.bf16.msra.mxu0 %v921
        %998 = vmatprep.subr.bf16.mxu0 0
        %999 = vmatpush1.bf16.msra.mxu0 %v922
        %1000 = vmatprep.subr.bf16.mxu0 0
        %1001 = vmatpush1.bf16.msra.mxu0 %v923
        %1002 = vmatprep.subr.bf16.mxu0 0
        %1003 = vmatpush1.bf16.msra.mxu0 %v924
        %1004 = vmatprep.subr.bf16.mxu0 0
        %1005 = vmatpush1.bf16.msra.mxu0 %v925
        %1006 = vmatprep.mubr.bf16.mxu0 %v715
        %1007 = vmatmul.mubr.bf16.gmra.mrb[0].mxu0 %v714
        %v1008 = vpop.f32.mrb[0].mxu0
        %v1009 = vadd.f32 0.0, %v1008
        %v1010 = vpop.f32.mrb[0].mxu0
        %v1011 = vpop.f32.mrb[0].mxu0
        %v1012 = vpop.f32.mrb[0].mxu0
        %1013 = vdwg.mxu0
        %1014 = vmatprep.subr.bf16.mxu0 0
        %1015 = vmatpush1.bf16.msra.mxu0 %v926
        %1016 = vmatprep.subr.bf16.mxu0 0
        %1017 = vmatpush1.bf16.msra.mxu0 %v927
        %1018 = vmatprep.subr.bf16.mxu0 0
        %1019 = vmatpush1.bf16.msra.mxu0 %v928
        %1020 = vmatprep.subr.bf16.mxu0 0
        %1021 = vmatpush1.bf16.msra.mxu0 %v929
        %1022 = vmatprep.subr.bf16.mxu0 0
        %1023 = vmatpush1.bf16.msra.mxu0 %v930
        %1024 = vmatprep.subr.bf16.mxu0 0
        %1025 = vmatpush1.bf16.msra.mxu0 %v931
        %1026 = vmatprep.subr.bf16.mxu0 0
        %1027 = vmatpush1.bf16.msra.mxu0 %v932
        %1028 = vmatprep.subr.bf16.mxu0 0
        %1029 = vmatpush1.bf16.msra.mxu0 %v933
        %1030 = vmatprep.subr.bf16.mxu0 0
        %1031 = vmatpush1.bf16.msra.mxu0 %v934
        %1032 = vmatprep.subr.bf16.mxu0 0
        %1033 = vmatpush1.bf16.msra.mxu0 %v935
        %1034 = vmatprep.subr.bf16.mxu0 0
        %1035 = vmatpush1.bf16.msra.mxu0 %v936
        %1036 = vmatprep.subr.bf16.mxu0 0
        %1037 = vmatpush1.bf16.msra.mxu0 %v937
        %1038 = vmatprep.subr.bf16.mxu0 0
        %1039 = vmatpush1.bf16.msra.mxu0 %v938
        %1040 = vmatprep.subr.bf16.mxu0 0
        %1041 = vmatpush1.bf16.msra.mxu0 %v939
        %1042 = vmatprep.subr.bf16.mxu0 0
        %1043 = vmatpush1.bf16.msra.mxu0 %v940
        %1044 = vmatprep.subr.bf16.mxu0 0
        %1045 = vmatpush1.bf16.msra.mxu0 %v941
        %1046 = vmatprep.mubr.bf16.mxu0 %v717
        %1047 = vmatmul.mubr.bf16.gmra.mrb[0].mxu0 %v716
        %v1048 = vpop.f32.mrb[0].mxu0
        %v1049 = vadd.f32 %v1009, %v1048
        %v1050 = vpop.f32.mrb[0].mxu0
        %v1051 = vpop.f32.mrb[0].mxu0
        %v1052 = vpop.f32.mrb[0].mxu0
        %1053 = vdwg.mxu0
        %v1054 = vld [vmem:[%s5] sm:$0x1]
        %v1055 = vld [vmem:[%s6] sm:$0x1]
        %1056 = vadd.xlane.f32.xlu0 %v1049
        %v1057 = vpop.xlane.xlu0 %1056
        %v1058 = vrcp.pop 128.0
        %v1059 = vmul.f32 %v1057, %v1058
        %v1060 = vsub.f32 %v1049, %v1059
        %v1061 = vmul.f32 %v1060, %v1060
        %1062 = vadd.xlane.f32.xlu0 %v1061
        %v1063 = vpop.xlane.xlu0 %1062
        %v1064 = vmul.f32 %v1063, %v1058
        %v1065 = vadd.f32 %v1064, 1e-05
        %v1066 = vrsqrt.pop %v1065
        %v1067 = vmul.f32 %v1060, %v1066
        %v1069 = vlaneseq
        %v1070 = vshrl.u32 %v1069, 7
        %v1071 = vsub.s32 0, %v1070
        %v1072 = vrot.slane %v1054, %v1071
        %v1074 = vmul.f32 %v1067, %v1072
        %v1076 = vlaneseq
        %v1077 = vshrl.u32 %v1076, 7
        %v1078 = vsub.s32 0, %v1077
        %v1079 = vrot.slane %v1055, %v1078
        %v1081 = vadd.f32 %v1074, %v1079
        %vm1082 = vcmp.gt.f32.partialorder %v1081, 0.0
        %v1083 = vmul.f32 %v1081, 0.2
        %v1084 = vsel %vm1082, %v1081, %v1083
        %v1085 = vpack.c.bf16 %v1084, %v1084
        %v1086 = vld [vmem:[%s7] sm:$0xf]
        %v1087 = vld [vmem:[%s7 + $0x4] sm:$0xf]
        %v1088 = vld [vmem:[%s7 + $0x8] sm:$0xf]
        %v1089 = vld [vmem:[%s7 + $0xc] sm:$0xf]
        %v1090 = vld [vmem:[%s7 + $0x10] sm:$0xf]
        %v1091 = vld [vmem:[%s7 + $0x14] sm:$0xf]
        %v1092 = vld [vmem:[%s7 + $0x18] sm:$0xf]
        %v1093 = vld [vmem:[%s7 + $0x1c] sm:$0xf]
        %v1094 = vld [vmem:[%s7 + $0x20] sm:$0xf]
        %v1095 = vld [vmem:[%s7 + $0x24] sm:$0xf]
        %v1096 = vld [vmem:[%s7 + $0x28] sm:$0xf]
        %v1097 = vld [vmem:[%s7 + $0x2c] sm:$0xf]
        %v1098 = vld [vmem:[%s7 + $0x30] sm:$0xf]
        %v1099 = vld [vmem:[%s7 + $0x34] sm:$0xf]
        %v1100 = vld [vmem:[%s7 + $0x38] sm:$0xf]
        %v1101 = vld [vmem:[%s7 + $0x3c] sm:$0xf]
        %v1118 = vunpack.c.l.b16 %v1086
        %v1119 = vunpack.c.l.b16 %v1087
        %v1120 = vunpack.c.l.b16 %v1088
        %v1121 = vunpack.c.l.b16 %v1089
        %v1122 = vunpack.c.l.b16 %v1090
        %v1123 = vunpack.c.l.b16 %v1091
        %v1124 = vunpack.c.l.b16 %v1092
        %v1125 = vunpack.c.l.b16 %v1093
        %v1126 = vunpack.c.l.b16 %v1094
        %v1127 = vunpack.c.l.b16 %v1095
        %v1128 = vunpack.c.l.b16 %v1096
        %v1129 = vunpack.c.l.b16 %v1097
        %v1130 = vunpack.c.l.b16 %v1098
        %v1131 = vunpack.c.l.b16 %v1099
        %v1132 = vunpack.c.l.b16 %v1100
        %v1133 = vunpack.c.l.b16 %v1101
        %v1134 = vpack.c.b16 %v1119, %v1118
        %v1135 = vpack.c.b16 %v1121, %v1120
        %v1136 = vpack.c.b16 %v1123, %v1122
        %v1137 = vpack.c.b16 %v1125, %v1124
        %v1138 = vpack.c.b16 %v1127, %v1126
        %v1139 = vpack.c.b16 %v1129, %v1128
        %v1140 = vpack.c.b16 %v1131, %v1130
        %v1141 = vpack.c.b16 %v1133, %v1132
        %1150 = vmatprep.subr.bf16.mxu0 0
        %1151 = vmatpush1.bf16.msra.mxu0 %v1134
        %1152 = vmatprep.subr.bf16.mxu0 0
        %1153 = vmatpush1.bf16.msra.mxu0 %v1135
        %1154 = vmatprep.subr.bf16.mxu0 0
        %1155 = vmatpush1.bf16.msra.mxu0 %v1136
        %1156 = vmatprep.subr.bf16.mxu0 0
        %1157 = vmatpush1.bf16.msra.mxu0 %v1137
        %1158 = vmatprep.subr.bf16.mxu0 0
        %1159 = vmatpush1.bf16.msra.mxu0 %v1138
        %1160 = vmatprep.subr.bf16.mxu0 0
        %1161 = vmatpush1.bf16.msra.mxu0 %v1139
        %1162 = vmatprep.subr.bf16.mxu0 0
        %1163 = vmatpush1.bf16.msra.mxu0 %v1140
        %1164 = vmatprep.subr.bf16.mxu0 0
        %1165 = vmatpush1.bf16.msra.mxu0 %v1141
        %1166 = vmatprep.subr.bf16.mxu0 0
        %1167 = vmatpush1.bf16.msra.mxu0 0
        %1168 = vmatprep.subr.bf16.mxu0 0
        %1169 = vmatpush1.bf16.msra.mxu0 0
        %1170 = vmatprep.subr.bf16.mxu0 0
        %1171 = vmatpush1.bf16.msra.mxu0 0
        %1172 = vmatprep.subr.bf16.mxu0 0
        %1173 = vmatpush1.bf16.msra.mxu0 0
        %1174 = vmatprep.subr.bf16.mxu0 0
        %1175 = vmatpush1.bf16.msra.mxu0 0
        %1176 = vmatprep.subr.bf16.mxu0 0
        %1177 = vmatpush1.bf16.msra.mxu0 0
        %1178 = vmatprep.subr.bf16.mxu0 0
        %1179 = vmatpush1.bf16.msra.mxu0 0
        %1180 = vmatprep.subr.bf16.mxu0 0
        %1181 = vmatpush1.bf16.msra.mxu0 0
        %1182 = vmatprep.mubr.bf16.mxu0 0
        %1183 = vmatmul.mubr.bf16.gmra.mrb[0].mxu0 %v1085
        %v1184 = vpop.f32.mrb[0].mxu0
        %v1185 = vadd.f32 0.0, %v1184
        %v1186 = vpop.f32.mrb[0].mxu0
        %v1187 = vpop.f32.mrb[0].mxu0
        %v1188 = vpop.f32.mrb[0].mxu0
        %1189 = vdwg.mxu0
        %v1190 = vld [vmem:[%s8] sm:$0x1]
        %v1191 = vld [vmem:[%s9] sm:$0x1]
        %vm1192 = vcmask 261120
        %v1193 = vsel %vm1192, %v1185, 0.0
        %1194 = vadd.xlane.f32.xlu0 %v1193
        %v1195 = vpop.xlane.xlu0 %1194
        %v1196 = vrcp.pop 32.0
        %v1197 = vmul.f32 %v1195, %v1196
        %v1198 = vsub.f32 %v1185, %v1197
        %v1199 = vmul.f32 %v1198, %v1198
        %v1200 = vsel %vm1192, %v1199, 0.0
        %1201 = vadd.xlane.f32.xlu0 %v1200
        %v1202 = vpop.xlane.xlu0 %1201
        %v1203 = vmul.f32 %v1202, %v1196
        %v1204 = vadd.f32 %v1203, 1e-05
        %v1205 = vrsqrt.pop %v1204
        %v1206 = vmul.f32 %v1198, %v1205
        %v1208 = vlaneseq
        %v1209 = vshrl.u32 %v1208, 7
        %v1210 = vsub.s32 0, %v1209
        %v1211 = vrot.slane %v1190, %v1210
        %v1213 = vmul.f32 %v1206, %v1211
        %v1215 = vlaneseq
        %v1216 = vshrl.u32 %v1215, 7
        %v1217 = vsub.s32 0, %v1216
        %v1218 = vrot.slane %v1191, %v1217
        %v1220 = vadd.f32 %v1213, %v1218
        %vm1221 = vcmp.gt.f32.partialorder %v1220, 0.0
        %v1222 = vmul.f32 %v1220, 0.2
        %v1223 = vsel %vm1221, %v1220, %v1222
        %v1224 = vpack.c.bf16 %v1223, %v1223
        %v1225 = vld [vmem:[%s10] sm:$0xf]
        %v1226 = vld [vmem:[%s10 + $0x4] sm:$0xf]
        %v1227 = vld [vmem:[%s10 + $0x8] sm:$0xf]
        %v1228 = vld [vmem:[%s10 + $0xc] sm:$0xf]
        %v1229 = vld [vmem:[%s11] sm:$0x1]
        %v1231 = vlaneseq
        %v1232 = vshrl.u32 %v1231, 7
        %v1233 = vsub.s32 0, %v1232
        %v1234 = vrot.slane %v1229, %v1233
        %v1240 = vunpack.c.l.b16 %v1225
        %v1241 = vunpack.c.l.b16 %v1226
        %v1242 = vunpack.c.l.b16 %v1227
        %v1243 = vunpack.c.l.b16 %v1228
        %v1244 = vpack.c.b16 %v1241, %v1240
        %v1245 = vpack.c.b16 %v1243, %v1242
        %v1249 = vsel %vm1192, %v1224, 0
        %1251 = vmatprep.subr.bf16.mxu0 0
        %1252 = vmatpush1.bf16.msra.mxu0 %v1244
        %1253 = vmatprep.subr.bf16.mxu0 0
        %1254 = vmatpush1.bf16.msra.mxu0 %v1245
        %1255 = vmatprep.subr.bf16.mxu0 0
        %1256 = vmatpush1.bf16.msra.mxu0 0
        %1257 = vmatprep.subr.bf16.mxu0 0
        %1258 = vmatpush1.bf16.msra.mxu0 0
        %1259 = vmatprep.subr.bf16.mxu0 0
        %1260 = vmatpush1.bf16.msra.mxu0 0
        %1261 = vmatprep.subr.bf16.mxu0 0
        %1262 = vmatpush1.bf16.msra.mxu0 0
        %1263 = vmatprep.subr.bf16.mxu0 0
        %1264 = vmatpush1.bf16.msra.mxu0 0
        %1265 = vmatprep.subr.bf16.mxu0 0
        %1266 = vmatpush1.bf16.msra.mxu0 0
        %1267 = vmatprep.subr.bf16.mxu0 0
        %1268 = vmatpush1.bf16.msra.mxu0 0
        %1269 = vmatprep.subr.bf16.mxu0 0
        %1270 = vmatpush1.bf16.msra.mxu0 0
        %1271 = vmatprep.subr.bf16.mxu0 0
        %1272 = vmatpush1.bf16.msra.mxu0 0
        %1273 = vmatprep.subr.bf16.mxu0 0
        %1274 = vmatpush1.bf16.msra.mxu0 0
        %1275 = vmatprep.subr.bf16.mxu0 0
        %1276 = vmatpush1.bf16.msra.mxu0 0
        %1277 = vmatprep.subr.bf16.mxu0 0
        %1278 = vmatpush1.bf16.msra.mxu0 0
        %1279 = vmatprep.subr.bf16.mxu0 0
        %1280 = vmatpush1.bf16.msra.mxu0 0
        %1281 = vmatprep.subr.bf16.mxu0 0
        %1282 = vmatpush1.bf16.msra.mxu0 0
        %1283 = vmatprep.mubr.bf16.mxu0 0
        %1284 = vmatmul.mubr.bf16.gmra.mrb[0].mxu0 %v1249
        %v1285 = vpop.f32.mrb[0].mxu0
        %v1286 = vadd.f32 %v1234, %v1285
        %v1287 = vpop.f32.mrb[0].mxu0
        %v1288 = vpop.f32.mrb[0].mxu0
        %v1289 = vpop.f32.mrb[0].mxu0
        %1290 = vdwg.mxu0
        %1291 = vst [vmem:[%s434] sm:$0xff] %v1286
        %s1292 = sand.u32 %s293, 1
        %s1293 = scalar_lea.sflag [#allocation4], %s1292
        %s1294 = sand.u32 %s293, 1
        %s1295 = smul.addr %s1294, 8
        %s1296 = scalar_lea.vmem [#allocation7], %s1295
        // Predicated region
        $region77: #{tpu_custom_call.1} parent=67 // pred_check
          %p1297 = pneg %p303
        $region78: #{tpu_custom_call.1} parent=67 // pred_check_branch
          %1299 = sbr.rel (%p1297) target = $region80
        $region79: #{tpu_custom_call.1} parent=67 // pred_region
          %s1301 = ssub.s32 128, 128
          %1302 = vsyncadd %s1293, %s1301
          %s1303 = smul.addr %s28, 128
          %s1304 = scalar_lea.hbm %s12, %s1303
          %s1306 = sshll.u32 %s1296, 4
          %s1307 = int_to_ptr.vmem [resolvable:$true] %s1306
          %1309 = dma.vmem_to_hbm [thread:$0]  %s1307, 128, %s1304, %s1293
        $region80: #{tpu_custom_call.1} parent=67 // pred_fallthru
          _
      $region68: #{tpu_custom_call.1} parent=5 // pred_fallthru
        _
      %p1310 = scmp.le.s32.totalorder 2, %s23
      // Predicated region
      $region81: #{tpu_custom_call.1} parent=5 // pred_check
        %p1311 = pneg %p1310
      $region82: #{tpu_custom_call.1} parent=5 // pred_check_branch
        %1313 = sbr.rel (%p1311) target = $region84
      $region83: #{tpu_custom_call.1} parent=5 // pred_region
        %s1314 = ssub.s32 %s23, 2
        // Predicated region
        $region85: #{tpu_custom_call.1} parent=83 // pred_check
          %p1315 = pneg %p309
        $region86: #{tpu_custom_call.1} parent=83 // pred_check_branch
          %1317 = sbr.rel (%p1315) target = $region88
        $region87: #{tpu_custom_call.1} parent=83 // pred_region
          %s1318 = sand.u32 %s294, 1
          %s1319 = scalar_lea.sflag [#allocation4], %s1318
          %s1320 = sand.u32 %s294, 1
          %s1321 = smul.addr %s1320, 8
          %s1322 = scalar_lea.vmem [#allocation7], %s1321
          %1323 = dma.done %s1319, 128
        $region88: #{tpu_custom_call.1} parent=83 // pred_fallthru
          _
      $region84: #{tpu_custom_call.1} parent=5 // pred_fallthru
        _
    $region6: #{tpu_custom_call.1} parent=1 // loop_footer
      %s27 = sadd.s32 1, %s23
    $region7: #{tpu_custom_call.1} parent=1 // loop_footer_branch
      %22 = sbr.rel target = $region3
    $region8: #{tpu_custom_call.1} parent=1 // loop_exit
      _
    %1324 = vsyncpa [#allocation3], 1
    %s1325 = scalar_lea.sflag [#allocation3], 1
    %1326 = vsyncpa %s1325, 1
    %1327 = vsyncpa [#allocation6], 1
    %1328 = vsyncpa [#allocation4], 1
    %s1329 = scalar_lea.sflag [#allocation4], 1
    %1330 = vsyncpa %s1329, 1

</llo_original>
